<compile_context>
chip_gen: v5e
topology: v5e:2x2
jax: 0.10.0
libtpu: 0.0.40
codegen_flags: <defaults>
</compile_context>

<pallas_src>
import functools

import jax
import jax.numpy as jnp
from jax.experimental import pallas as pl
from jax.experimental.pallas import tpu as pltpu


def _cdiv(a, b):
    return (a + b - 1) // b


def _round_up(a, b):
    return b * _cdiv(a, b)


_BP = 8  # batch rows padded to one sublane tile so per-step slices are aligned


# ---------------------------------------------------------------------------
# Fused Pallas kernel: all LSTM layers + time loop + final FC in one launch
# ---------------------------------------------------------------------------
def _fused_lstm_kernel(x_ref, wih_ref, whh_ref, b_ref, fcw_ref, fcb_ref, o_ref):
    """x_ref  : (T*BP, IN_P)  time-major input, batch padded to BP, features padded
       wih_ref: (L, IN_P, 4H) per-layer W_ih^T (rows past the real input dim = 0)
       whh_ref: (L, H, 4H)    per-layer W_hh^T (compact gate axis, order i,f,g,o)
       b_ref  : (L, 1, 4H)    per-layer b_ih + b_hh
       fcw_ref: (H, OP)       FC weight (W^T), output dim zero-padded to OP
       fcb_ref: (1, OP)       FC bias, padded
       o_ref  : (BP, OP)      padded output (real result lives in [:B, :O])
    """
    TBP, IN_P = x_ref.shape
    L, H, G = whh_ref.shape          # G = 4*H
    BP = o_ref.shape[0]
    T = TBP // BP
    f32 = jnp.float32

    seq = x_ref[...].astype(f32)     # whole sequence resident on-chip

    h = None
    for layer in range(L):
        w_ih = wih_ref[layer]        # (IN_P, G)
        w_hh = whh_ref[layer]        # (H, G)
        bias = b_ref[layer]          # (1, G)

        # Input->hidden projection for ALL timesteps as one matmul; bias folded
        # in once per layer (off the serial recurrence critical path).
        xproj = jnp.dot(seq, w_ih, preferred_element_type=f32) + bias  # (T*BP, G)

        h = jnp.zeros((BP, H), f32)
        c = jnp.zeros((BP, H), f32)
        outs = []
        for t in range(T):
            g_x = xproj[t * BP:(t + 1) * BP, :]        # sublane-tile aligned
            # Only the small (BP,H)@(H,4H) recurrent matmul stays in the loop.
            gates = g_x + jnp.dot(h, w_hh, preferred_element_type=f32)
            sig = jax.nn.sigmoid(gates)                # one EUP pass, all gates
            th = jnp.tanh(gates)                       # one EUP pass, all gates
            i_g = sig[:, 0 * H:1 * H]
            f_g = sig[:, 1 * H:2 * H]
            g_g = th[:, 2 * H:3 * H]
            o_g = sig[:, 3 * H:4 * H]
            c = f_g * c + i_g * g_g
            h = o_g * jnp.tanh(c)
            if layer < L - 1:
                outs.append(h)

        if layer < L - 1:
            nxt = jnp.concatenate(outs, axis=0)        # (T*BP, H) time-major
            if IN_P > H:                               # keep width = IN_P (inert zeros)
                nxt = jnp.concatenate(
                    [nxt, jnp.zeros((TBP, IN_P - H), f32)], axis=-1)
            seq = nxt

    # Final FC on the last timestep of the top layer; single dense (BP, OP) store.
    out = jnp.dot(h, fcw_ref[...], preferred_element_type=f32) + fcb_ref[...]
    o_ref[...] = out.astype(o_ref.dtype)


def _fused_forward(x_pad, w_ih, w_hh, b, fc_w, fc_b, bp):
    OP = fc_w.shape[1]
    return pl.pallas_call(
        _fused_lstm_kernel,
        out_shape=jax.ShapeDtypeStruct((bp, OP), jnp.float32),
        in_specs=[
            pl.BlockSpec(x_pad.shape, lambda: (0, 0)),
            pl.BlockSpec(w_ih.shape, lambda: (0, 0, 0)),
            pl.BlockSpec(w_hh.shape, lambda: (0, 0, 0)),
            pl.BlockSpec(b.shape, lambda: (0, 0, 0)),
            pl.BlockSpec(fc_w.shape, lambda: (0, 0)),
            pl.BlockSpec(fc_b.shape, lambda: (0, 0)),
        ],
        out_specs=pl.BlockSpec((bp, OP), lambda: (0, 0)),
        compiler_params=pltpu.CompilerParams(
            vmem_limit_bytes=32 * 1024 * 1024,  # actual footprint < 0.25 MiB
        ),
    )(x_pad, w_ih, w_hh, b, fc_w, fc_b)


# ---------------------------------------------------------------------------
# Top-level forward (wrapper-side layout plumbing + output slice)
# ---------------------------------------------------------------------------
@functools.partial(jax.jit, static_argnames=("output_size",))
def lstm_model_forward(x, packed, output_size=1):
    B, T, F = x.shape
    IN_P = packed["w_ih"].shape[1]
    bp = _round_up(B, _BP)
    # time-major, batch padded to a sublane tile, features zero-padded:
    # one contiguous (T*BP, IN_P) slab for the layer-0 projection matmul.
    x_tm = jnp.swapaxes(x.astype(jnp.float32), 0, 1)           # (T, B, F)
    x_tm = jnp.pad(x_tm, ((0, 0), (0, bp - B), (0, IN_P - F)))  # (T, BP, IN_P)
    x_pad = x_tm.reshape(T * bp, IN_P)
    out_pad = _fused_forward(x_pad, packed["w_ih"], packed["w_hh"],
                             packed["b"], packed["fc_w"], packed["fc_b"], bp)
    return out_pad[:B, :output_size]


# ---------------------------------------------------------------------------
# Parameter init (PyTorch layout / init) + packing into the kernel layout
# ---------------------------------------------------------------------------
def init_params(key, num_features, hidden_dim, num_layers, output_size):
    """Raw torch.nn.LSTM / nn.Linear shaped parameters."""
    params = {"lstm": []}
    bound = 1.0 / float(hidden_dim) ** 0.5
    for layer in range(num_layers):
        in_dim = num_features if layer == 0 else hidden_dim
        key, k1, k2, k3, k4 = jax.random.split(key, 5)
        w_ih = jax.random.uniform(k1, (4 * hidden_dim, in_dim),
                                  minval=-bound, maxval=bound, dtype=jnp.float32)
        w_hh = jax.random.uniform(k2, (4 * hidden_dim, hidden_dim),
                                  minval=-bound, maxval=bound, dtype=jnp.float32)
        b_ih = jax.random.uniform(k3, (4 * hidden_dim,),
                                  minval=-bound, maxval=bound, dtype=jnp.float32)
        b_hh = jax.random.uniform(k4, (4 * hidden_dim,),
                                  minval=-bound, maxval=bound, dtype=jnp.float32)
        params["lstm"].append((w_ih, w_hh, b_ih, b_hh))
    key, k5, k6 = jax.random.split(key, 3)
    params["fc_w"] = jax.random.uniform(k5, (output_size, hidden_dim),
                                        minval=-bound, maxval=bound, dtype=jnp.float32)
    params["fc_b"] = jax.random.uniform(k6, (output_size,),
                                        minval=-bound, maxval=bound, dtype=jnp.float32)
    return params


def pack_params(raw, num_features, hidden_dim, num_layers, output_size):
    """Transpose / lightly pad raw params into the compact fused-kernel layout."""
    H = hidden_dim
    G = 4 * H
    IN_P = _round_up(max(num_features, hidden_dim), 8)
    OP = _round_up(output_size, 128)
    wih_list, whh_list, b_list = [], [], []
    for (w_ih, w_hh, b_ih, b_hh) in raw["lstm"]:
        in_dim = w_ih.shape[1]
        wih_list.append(jnp.pad(w_ih.T, ((0, IN_P - in_dim), (0, 0))))  # (IN_P, 4H)
        whh_list.append(w_hh.T)                                          # (H, 4H)
        b_list.append((b_ih + b_hh).reshape(1, G))
    return {
        "w_ih": jnp.stack(wih_list),                                     # (L, IN_P, 4H)
        "w_hh": jnp.stack(whh_list),                                     # (L, H, 4H)
        "b": jnp.stack(b_list),                                          # (L, 1, 4H)
        "fc_w": jnp.pad(raw["fc_w"].T, ((0, 0), (0, OP - output_size))),  # (H, OP)
        "fc_b": jnp.pad(raw["fc_b"], ((0, OP - output_size),)).reshape(1, OP),
    }


# ---------------------------------------------------------------------------
# Pure-JAX reference (same math as torch.nn.LSTM + Linear), uses RAW params
# ---------------------------------------------------------------------------
def reference_forward(x, raw):
    h_seq = x
    for (w_ih, w_hh, b_ih, b_hh) in raw["lstm"]:
        B, T, _ = h_seq.shape
        H = w_hh.shape[1]
        h = jnp.zeros((B, H), jnp.float32)
        c = jnp.zeros((B, H), jnp.float32)

        def step(carry, x_t, w_ih=w_ih, w_hh=w_hh, b_ih=b_ih, b_hh=b_hh, H=H):
            h, c = carry
            gates = x_t @ w_ih.T + h @ w_hh.T + b_ih + b_hh
            i = jax.nn.sigmoid(gates[:, 0 * H:1 * H])
            f = jax.nn.sigmoid(gates[:, 1 * H:2 * H])
            g = jnp.tanh(gates[:, 2 * H:3 * H])
            o = jax.nn.sigmoid(gates[:, 3 * H:4 * H])
            c = f * c + i * g
            h = o * jnp.tanh(c)
            return (h, c), h

        (_, _), hs = jax.lax.scan(step, (h, c), jnp.swapaxes(h_seq, 0, 1))
        h_seq = jnp.swapaxes(hs, 0, 1)
    return h_seq[:, -1, :] @ raw["fc_w"].T + raw["fc_b"]


# ---------------------------------------------------------------------------
if __name__ == "__main__":
    num_features = 16
    hidden_dim = 32
    num_layers = 2
    output_size = 1
    batch = 2
    seq_len = 8

    key = jax.random.PRNGKey(0)
    key, pkey, xkey = jax.random.split(key, 3)
    raw_params = init_params(pkey, num_features, hidden_dim, num_layers, output_size)
    packed = pack_params(raw_params, num_features, hidden_dim, num_layers, output_size)
    x = jax.random.normal(xkey, (batch, seq_len, num_features), dtype=jnp.float32)

    out = lstm_model_forward(x, packed, output_size=output_size)
    out = jax.block_until_ready(out)

    ref = reference_forward(x, raw_params)
    assert out.shape == (batch, output_size), out.shape
    assert jnp.allclose(out, ref, atol=1e-3, rtol=1e-3), (out, ref)

    print("KERNEL_OK")
</pallas_src>

<mosaic_0001>
module attributes {stable_mosaic.version = 11 : i64} {
  func.func @_fused_lstm_kernel(%arg0: memref<64x32xf32, #tpu.memory_space<vmem>>, %arg1: memref<2x32x128xf32, #tpu.memory_space<vmem>>, %arg2: memref<2x32x128xf32, #tpu.memory_space<vmem>>, %arg3: memref<2x1x128xf32, #tpu.memory_space<vmem>>, %arg4: memref<32x128xf32, #tpu.memory_space<vmem>>, %arg5: memref<1x128xf32, #tpu.memory_space<vmem>>, %arg6: memref<8x128xf32, #tpu.memory_space<vmem>>) attributes {dimension_semantics = [], scalar_prefetch = 0 : i64, scratch_operands = 0 : i64, tpu.core_type = #tpu.core_type<tc>} {
    %c0 = arith.constant 0 : index
    %c0_0 = arith.constant 0 : index
    %0 = vector.load %arg0[%c0, %c0_0] : memref<64x32xf32, #tpu.memory_space<vmem>>, vector<64x32xf32>
    %c0_1 = arith.constant 0 : index
    %c0_2 = arith.constant 0 : index
    %c0_3 = arith.constant 0 : index
    %1 = vector.load %arg1[%c0_1, %c0_2, %c0_3] : memref<2x32x128xf32, #tpu.memory_space<vmem>>, vector<1x32x128xf32>
    %2 = vector.shape_cast %1 : vector<1x32x128xf32> to vector<32x128xf32>
    %c0_4 = arith.constant 0 : index
    %c0_5 = arith.constant 0 : index
    %c0_6 = arith.constant 0 : index
    %3 = vector.load %arg2[%c0_4, %c0_5, %c0_6] : memref<2x32x128xf32, #tpu.memory_space<vmem>>, vector<1x32x128xf32>
    %4 = vector.shape_cast %3 : vector<1x32x128xf32> to vector<32x128xf32>
    %c0_7 = arith.constant 0 : index
    %c0_8 = arith.constant 0 : index
    %c0_9 = arith.constant 0 : index
    %5 = vector.load %arg3[%c0_7, %c0_8, %c0_9] : memref<2x1x128xf32, #tpu.memory_space<vmem>>, vector<1x1x128xf32>
    %6 = vector.shape_cast %5 : vector<1x1x128xf32> to vector<1x128xf32>
    %cst = arith.constant dense<0.000000e+00> : vector<64x128xf32>
    %7 = tpu.matmul %0, %2, %cst {dimension_numbers = #tpu.dot_dimension_numbers<[1], [0], [0], [1], [0, 0, 1, 1], [], []>} : vector<64x32xf32>, vector<32x128xf32>, vector<64x128xf32> -> vector<64x128xf32>
    %8 = vector.broadcast %6 : vector<1x128xf32> to vector<64x128xf32>
    %9 = arith.addf %7, %8 : vector<64x128xf32>
    %cst_10 = arith.constant 0.000000e+00 : f32
    %10 = vector.broadcast %cst_10 : f32 to vector<8x32xf32>
    %cst_11 = arith.constant 0.000000e+00 : f32
    %11 = vector.broadcast %cst_11 : f32 to vector<8x32xf32>
    %12 = vector.extract_strided_slice %9 {offsets = [0, 0], sizes = [8, 128], strides = [1, 1]} : vector<64x128xf32> to vector<8x128xf32>
    %cst_12 = arith.constant dense<0.000000e+00> : vector<8x128xf32>
    %13 = tpu.matmul %10, %4, %cst_12 {dimension_numbers = #tpu.dot_dimension_numbers<[1], [0], [0], [1], [0, 0, 1, 1], [], []>} : vector<8x32xf32>, vector<32x128xf32>, vector<8x128xf32> -> vector<8x128xf32>
    %14 = arith.addf %12, %13 : vector<8x128xf32>
    %15 = arith.negf %14 : vector<8x128xf32>
    %16 = math.exp %15 : vector<8x128xf32>
    %cst_13 = arith.constant 1.000000e+00 : f32
    %17 = vector.broadcast %cst_13 : f32 to vector<8x128xf32>
    %18 = arith.addf %17, %16 : vector<8x128xf32>
    %19 = arith.divf %17, %18 : vector<8x128xf32>
    %20 = math.tanh %14 : vector<8x128xf32>
    %21 = vector.extract_strided_slice %19 {offsets = [0, 0], sizes = [8, 32], strides = [1, 1]} : vector<8x128xf32> to vector<8x32xf32>
    %22 = vector.extract_strided_slice %19 {offsets = [0, 32], sizes = [8, 32], strides = [1, 1]} : vector<8x128xf32> to vector<8x32xf32>
    %23 = vector.extract_strided_slice %20 {offsets = [0, 64], sizes = [8, 32], strides = [1, 1]} : vector<8x128xf32> to vector<8x32xf32>
    %24 = vector.extract_strided_slice %19 {offsets = [0, 96], sizes = [8, 32], strides = [1, 1]} : vector<8x128xf32> to vector<8x32xf32>
    %25 = arith.mulf %22, %11 : vector<8x32xf32>
    %26 = arith.mulf %21, %23 : vector<8x32xf32>
    %27 = arith.addf %25, %26 : vector<8x32xf32>
    %28 = math.tanh %27 : vector<8x32xf32>
    %29 = arith.mulf %24, %28 : vector<8x32xf32>
    %30 = vector.extract_strided_slice %9 {offsets = [8, 0], sizes = [8, 128], strides = [1, 1]} : vector<64x128xf32> to vector<8x128xf32>
    %cst_14 = arith.constant dense<0.000000e+00> : vector<8x128xf32>
    %31 = tpu.matmul %29, %4, %cst_14 {dimension_numbers = #tpu.dot_dimension_numbers<[1], [0], [0], [1], [0, 0, 1, 1], [], []>} : vector<8x32xf32>, vector<32x128xf32>, vector<8x128xf32> -> vector<8x128xf32>
    %32 = arith.addf %30, %31 : vector<8x128xf32>
    %33 = arith.negf %32 : vector<8x128xf32>
    %34 = math.exp %33 : vector<8x128xf32>
    %cst_15 = arith.constant 1.000000e+00 : f32
    %35 = vector.broadcast %cst_15 : f32 to vector<8x128xf32>
    %36 = arith.addf %35, %34 : vector<8x128xf32>
    %37 = arith.divf %35, %36 : vector<8x128xf32>
    %38 = math.tanh %32 : vector<8x128xf32>
    %39 = vector.extract_strided_slice %37 {offsets = [0, 0], sizes = [8, 32], strides = [1, 1]} : vector<8x128xf32> to vector<8x32xf32>
    %40 = vector.extract_strided_slice %37 {offsets = [0, 32], sizes = [8, 32], strides = [1, 1]} : vector<8x128xf32> to vector<8x32xf32>
    %41 = vector.extract_strided_slice %38 {offsets = [0, 64], sizes = [8, 32], strides = [1, 1]} : vector<8x128xf32> to vector<8x32xf32>
    %42 = vector.extract_strided_slice %37 {offsets = [0, 96], sizes = [8, 32], strides = [1, 1]} : vector<8x128xf32> to vector<8x32xf32>
    %43 = arith.mulf %40, %27 : vector<8x32xf32>
    %44 = arith.mulf %39, %41 : vector<8x32xf32>
    %45 = arith.addf %43, %44 : vector<8x32xf32>
    %46 = math.tanh %45 : vector<8x32xf32>
    %47 = arith.mulf %42, %46 : vector<8x32xf32>
    %48 = vector.extract_strided_slice %9 {offsets = [16, 0], sizes = [8, 128], strides = [1, 1]} : vector<64x128xf32> to vector<8x128xf32>
    %cst_16 = arith.constant dense<0.000000e+00> : vector<8x128xf32>
    %49 = tpu.matmul %47, %4, %cst_16 {dimension_numbers = #tpu.dot_dimension_numbers<[1], [0], [0], [1], [0, 0, 1, 1], [], []>} : vector<8x32xf32>, vector<32x128xf32>, vector<8x128xf32> -> vector<8x128xf32>
    %50 = arith.addf %48, %49 : vector<8x128xf32>
    %51 = arith.negf %50 : vector<8x128xf32>
    %52 = math.exp %51 : vector<8x128xf32>
    %cst_17 = arith.constant 1.000000e+00 : f32
    %53 = vector.broadcast %cst_17 : f32 to vector<8x128xf32>
    %54 = arith.addf %53, %52 : vector<8x128xf32>
    %55 = arith.divf %53, %54 : vector<8x128xf32>
    %56 = math.tanh %50 : vector<8x128xf32>
    %57 = vector.extract_strided_slice %55 {offsets = [0, 0], sizes = [8, 32], strides = [1, 1]} : vector<8x128xf32> to vector<8x32xf32>
    %58 = vector.extract_strided_slice %55 {offsets = [0, 32], sizes = [8, 32], strides = [1, 1]} : vector<8x128xf32> to vector<8x32xf32>
    %59 = vector.extract_strided_slice %56 {offsets = [0, 64], sizes = [8, 32], strides = [1, 1]} : vector<8x128xf32> to vector<8x32xf32>
    %60 = vector.extract_strided_slice %55 {offsets = [0, 96], sizes = [8, 32], strides = [1, 1]} : vector<8x128xf32> to vector<8x32xf32>
    %61 = arith.mulf %58, %45 : vector<8x32xf32>
    %62 = arith.mulf %57, %59 : vector<8x32xf32>
    %63 = arith.addf %61, %62 : vector<8x32xf32>
    %64 = math.tanh %63 : vector<8x32xf32>
    %65 = arith.mulf %60, %64 : vector<8x32xf32>
    %66 = vector.extract_strided_slice %9 {offsets = [24, 0], sizes = [8, 128], strides = [1, 1]} : vector<64x128xf32> to vector<8x128xf32>
    %cst_18 = arith.constant dense<0.000000e+00> : vector<8x128xf32>
    %67 = tpu.matmul %65, %4, %cst_18 {dimension_numbers = #tpu.dot_dimension_numbers<[1], [0], [0], [1], [0, 0, 1, 1], [], []>} : vector<8x32xf32>, vector<32x128xf32>, vector<8x128xf32> -> vector<8x128xf32>
    %68 = arith.addf %66, %67 : vector<8x128xf32>
    %69 = arith.negf %68 : vector<8x128xf32>
    %70 = math.exp %69 : vector<8x128xf32>
    %cst_19 = arith.constant 1.000000e+00 : f32
    %71 = vector.broadcast %cst_19 : f32 to vector<8x128xf32>
    %72 = arith.addf %71, %70 : vector<8x128xf32>
    %73 = arith.divf %71, %72 : vector<8x128xf32>
    %74 = math.tanh %68 : vector<8x128xf32>
    %75 = vector.extract_strided_slice %73 {offsets = [0, 0], sizes = [8, 32], strides = [1, 1]} : vector<8x128xf32> to vector<8x32xf32>
    %76 = vector.extract_strided_slice %73 {offsets = [0, 32], sizes = [8, 32], strides = [1, 1]} : vector<8x128xf32> to vector<8x32xf32>
    %77 = vector.extract_strided_slice %74 {offsets = [0, 64], sizes = [8, 32], strides = [1, 1]} : vector<8x128xf32> to vector<8x32xf32>
    %78 = vector.extract_strided_slice %73 {offsets = [0, 96], sizes = [8, 32], strides = [1, 1]} : vector<8x128xf32> to vector<8x32xf32>
    %79 = arith.mulf %76, %63 : vector<8x32xf32>
    %80 = arith.mulf %75, %77 : vector<8x32xf32>
    %81 = arith.addf %79, %80 : vector<8x32xf32>
    %82 = math.tanh %81 : vector<8x32xf32>
    %83 = arith.mulf %78, %82 : vector<8x32xf32>
    %84 = vector.extract_strided_slice %9 {offsets = [32, 0], sizes = [8, 128], strides = [1, 1]} : vector<64x128xf32> to vector<8x128xf32>
    %cst_20 = arith.constant dense<0.000000e+00> : vector<8x128xf32>
    %85 = tpu.matmul %83, %4, %cst_20 {dimension_numbers = #tpu.dot_dimension_numbers<[1], [0], [0], [1], [0, 0, 1, 1], [], []>} : vector<8x32xf32>, vector<32x128xf32>, vector<8x128xf32> -> vector<8x128xf32>
    %86 = arith.addf %84, %85 : vector<8x128xf32>
    %87 = arith.negf %86 : vector<8x128xf32>
    %88 = math.exp %87 : vector<8x128xf32>
    %cst_21 = arith.constant 1.000000e+00 : f32
    %89 = vector.broadcast %cst_21 : f32 to vector<8x128xf32>
    %90 = arith.addf %89, %88 : vector<8x128xf32>
    %91 = arith.divf %89, %90 : vector<8x128xf32>
    %92 = math.tanh %86 : vector<8x128xf32>
    %93 = vector.extract_strided_slice %91 {offsets = [0, 0], sizes = [8, 32], strides = [1, 1]} : vector<8x128xf32> to vector<8x32xf32>
    %94 = vector.extract_strided_slice %91 {offsets = [0, 32], sizes = [8, 32], strides = [1, 1]} : vector<8x128xf32> to vector<8x32xf32>
    %95 = vector.extract_strided_slice %92 {offsets = [0, 64], sizes = [8, 32], strides = [1, 1]} : vector<8x128xf32> to vector<8x32xf32>
    %96 = vector.extract_strided_slice %91 {offsets = [0, 96], sizes = [8, 32], strides = [1, 1]} : vector<8x128xf32> to vector<8x32xf32>
    %97 = arith.mulf %94, %81 : vector<8x32xf32>
    %98 = arith.mulf %93, %95 : vector<8x32xf32>
    %99 = arith.addf %97, %98 : vector<8x32xf32>
    %100 = math.tanh %99 : vector<8x32xf32>
    %101 = arith.mulf %96, %100 : vector<8x32xf32>
    %102 = vector.extract_strided_slice %9 {offsets = [40, 0], sizes = [8, 128], strides = [1, 1]} : vector<64x128xf32> to vector<8x128xf32>
    %cst_22 = arith.constant dense<0.000000e+00> : vector<8x128xf32>
    %103 = tpu.matmul %101, %4, %cst_22 {dimension_numbers = #tpu.dot_dimension_numbers<[1], [0], [0], [1], [0, 0, 1, 1], [], []>} : vector<8x32xf32>, vector<32x128xf32>, vector<8x128xf32> -> vector<8x128xf32>
    %104 = arith.addf %102, %103 : vector<8x128xf32>
    %105 = arith.negf %104 : vector<8x128xf32>
    %106 = math.exp %105 : vector<8x128xf32>
    %cst_23 = arith.constant 1.000000e+00 : f32
    %107 = vector.broadcast %cst_23 : f32 to vector<8x128xf32>
    %108 = arith.addf %107, %106 : vector<8x128xf32>
    %109 = arith.divf %107, %108 : vector<8x128xf32>
    %110 = math.tanh %104 : vector<8x128xf32>
    %111 = vector.extract_strided_slice %109 {offsets = [0, 0], sizes = [8, 32], strides = [1, 1]} : vector<8x128xf32> to vector<8x32xf32>
    %112 = vector.extract_strided_slice %109 {offsets = [0, 32], sizes = [8, 32], strides = [1, 1]} : vector<8x128xf32> to vector<8x32xf32>
    %113 = vector.extract_strided_slice %110 {offsets = [0, 64], sizes = [8, 32], strides = [1, 1]} : vector<8x128xf32> to vector<8x32xf32>
    %114 = vector.extract_strided_slice %109 {offsets = [0, 96], sizes = [8, 32], strides = [1, 1]} : vector<8x128xf32> to vector<8x32xf32>
    %115 = arith.mulf %112, %99 : vector<8x32xf32>
    %116 = arith.mulf %111, %113 : vector<8x32xf32>
    %117 = arith.addf %115, %116 : vector<8x32xf32>
    %118 = math.tanh %117 : vector<8x32xf32>
    %119 = arith.mulf %114, %118 : vector<8x32xf32>
    %120 = vector.extract_strided_slice %9 {offsets = [48, 0], sizes = [8, 128], strides = [1, 1]} : vector<64x128xf32> to vector<8x128xf32>
    %cst_24 = arith.constant dense<0.000000e+00> : vector<8x128xf32>
    %121 = tpu.matmul %119, %4, %cst_24 {dimension_numbers = #tpu.dot_dimension_numbers<[1], [0], [0], [1], [0, 0, 1, 1], [], []>} : vector<8x32xf32>, vector<32x128xf32>, vector<8x128xf32> -> vector<8x128xf32>
    %122 = arith.addf %120, %121 : vector<8x128xf32>
    %123 = arith.negf %122 : vector<8x128xf32>
    %124 = math.exp %123 : vector<8x128xf32>
    %cst_25 = arith.constant 1.000000e+00 : f32
    %125 = vector.broadcast %cst_25 : f32 to vector<8x128xf32>
    %126 = arith.addf %125, %124 : vector<8x128xf32>
    %127 = arith.divf %125, %126 : vector<8x128xf32>
    %128 = math.tanh %122 : vector<8x128xf32>
    %129 = vector.extract_strided_slice %127 {offsets = [0, 0], sizes = [8, 32], strides = [1, 1]} : vector<8x128xf32> to vector<8x32xf32>
    %130 = vector.extract_strided_slice %127 {offsets = [0, 32], sizes = [8, 32], strides = [1, 1]} : vector<8x128xf32> to vector<8x32xf32>
    %131 = vector.extract_strided_slice %128 {offsets = [0, 64], sizes = [8, 32], strides = [1, 1]} : vector<8x128xf32> to vector<8x32xf32>
    %132 = vector.extract_strided_slice %127 {offsets = [0, 96], sizes = [8, 32], strides = [1, 1]} : vector<8x128xf32> to vector<8x32xf32>
    %133 = arith.mulf %130, %117 : vector<8x32xf32>
    %134 = arith.mulf %129, %131 : vector<8x32xf32>
    %135 = arith.addf %133, %134 : vector<8x32xf32>
    %136 = math.tanh %135 : vector<8x32xf32>
    %137 = arith.mulf %132, %136 : vector<8x32xf32>
    %138 = vector.extract_strided_slice %9 {offsets = [56, 0], sizes = [8, 128], strides = [1, 1]} : vector<64x128xf32> to vector<8x128xf32>
    %cst_26 = arith.constant dense<0.000000e+00> : vector<8x128xf32>
    %139 = tpu.matmul %137, %4, %cst_26 {dimension_numbers = #tpu.dot_dimension_numbers<[1], [0], [0], [1], [0, 0, 1, 1], [], []>} : vector<8x32xf32>, vector<32x128xf32>, vector<8x128xf32> -> vector<8x128xf32>
    %140 = arith.addf %138, %139 : vector<8x128xf32>
    %141 = arith.negf %140 : vector<8x128xf32>
    %142 = math.exp %141 : vector<8x128xf32>
    %cst_27 = arith.constant 1.000000e+00 : f32
    %143 = vector.broadcast %cst_27 : f32 to vector<8x128xf32>
    %144 = arith.addf %143, %142 : vector<8x128xf32>
    %145 = arith.divf %143, %144 : vector<8x128xf32>
    %146 = math.tanh %140 : vector<8x128xf32>
    %147 = vector.extract_strided_slice %145 {offsets = [0, 0], sizes = [8, 32], strides = [1, 1]} : vector<8x128xf32> to vector<8x32xf32>
    %148 = vector.extract_strided_slice %145 {offsets = [0, 32], sizes = [8, 32], strides = [1, 1]} : vector<8x128xf32> to vector<8x32xf32>
    %149 = vector.extract_strided_slice %146 {offsets = [0, 64], sizes = [8, 32], strides = [1, 1]} : vector<8x128xf32> to vector<8x32xf32>
    %150 = vector.extract_strided_slice %145 {offsets = [0, 96], sizes = [8, 32], strides = [1, 1]} : vector<8x128xf32> to vector<8x32xf32>
    %151 = arith.mulf %148, %135 : vector<8x32xf32>
    %152 = arith.mulf %147, %149 : vector<8x32xf32>
    %153 = arith.addf %151, %152 : vector<8x32xf32>
    %154 = math.tanh %153 : vector<8x32xf32>
    %155 = arith.mulf %150, %154 : vector<8x32xf32>
    %156 = tpu.concatenate %29, %47, %65, %83, %101, %119, %137, %155 in 0 : vector<8x32xf32>, vector<8x32xf32>, vector<8x32xf32>, vector<8x32xf32>, vector<8x32xf32>, vector<8x32xf32>, vector<8x32xf32>, vector<8x32xf32> -> vector<64x32xf32>
    %c1 = arith.constant 1 : index
    %c0_28 = arith.constant 0 : index
    %c0_29 = arith.constant 0 : index
    %157 = vector.load %arg1[%c1, %c0_28, %c0_29] : memref<2x32x128xf32, #tpu.memory_space<vmem>>, vector<1x32x128xf32>
    %158 = vector.shape_cast %157 : vector<1x32x128xf32> to vector<32x128xf32>
    %c1_30 = arith.constant 1 : index
    %c0_31 = arith.constant 0 : index
    %c0_32 = arith.constant 0 : index
    %159 = vector.load %arg2[%c1_30, %c0_31, %c0_32] : memref<2x32x128xf32, #tpu.memory_space<vmem>>, vector<1x32x128xf32>
    %160 = vector.shape_cast %159 : vector<1x32x128xf32> to vector<32x128xf32>
    %c1_33 = arith.constant 1 : index
    %c0_34 = arith.constant 0 : index
    %c0_35 = arith.constant 0 : index
    %161 = vector.load %arg3[%c1_33, %c0_34, %c0_35] : memref<2x1x128xf32, #tpu.memory_space<vmem>>, vector<1x1x128xf32>
    %162 = vector.shape_cast %161 : vector<1x1x128xf32> to vector<1x128xf32>
    %cst_36 = arith.constant dense<0.000000e+00> : vector<64x128xf32>
    %163 = tpu.matmul %156, %158, %cst_36 {dimension_numbers = #tpu.dot_dimension_numbers<[1], [0], [0], [1], [0, 0, 1, 1], [], []>} : vector<64x32xf32>, vector<32x128xf32>, vector<64x128xf32> -> vector<64x128xf32>
    %164 = vector.broadcast %162 : vector<1x128xf32> to vector<64x128xf32>
    %165 = arith.addf %163, %164 : vector<64x128xf32>
    %cst_37 = arith.constant 0.000000e+00 : f32
    %166 = vector.broadcast %cst_37 : f32 to vector<8x32xf32>
    %cst_38 = arith.constant 0.000000e+00 : f32
    %167 = vector.broadcast %cst_38 : f32 to vector<8x32xf32>
    %168 = vector.extract_strided_slice %165 {offsets = [0, 0], sizes = [8, 128], strides = [1, 1]} : vector<64x128xf32> to vector<8x128xf32>
    %cst_39 = arith.constant dense<0.000000e+00> : vector<8x128xf32>
    %169 = tpu.matmul %166, %160, %cst_39 {dimension_numbers = #tpu.dot_dimension_numbers<[1], [0], [0], [1], [0, 0, 1, 1], [], []>} : vector<8x32xf32>, vector<32x128xf32>, vector<8x128xf32> -> vector<8x128xf32>
    %170 = arith.addf %168, %169 : vector<8x128xf32>
    %171 = arith.negf %170 : vector<8x128xf32>
    %172 = math.exp %171 : vector<8x128xf32>
    %cst_40 = arith.constant 1.000000e+00 : f32
    %173 = vector.broadcast %cst_40 : f32 to vector<8x128xf32>
    %174 = arith.addf %173, %172 : vector<8x128xf32>
    %175 = arith.divf %173, %174 : vector<8x128xf32>
    %176 = math.tanh %170 : vector<8x128xf32>
    %177 = vector.extract_strided_slice %175 {offsets = [0, 0], sizes = [8, 32], strides = [1, 1]} : vector<8x128xf32> to vector<8x32xf32>
    %178 = vector.extract_strided_slice %175 {offsets = [0, 32], sizes = [8, 32], strides = [1, 1]} : vector<8x128xf32> to vector<8x32xf32>
    %179 = vector.extract_strided_slice %176 {offsets = [0, 64], sizes = [8, 32], strides = [1, 1]} : vector<8x128xf32> to vector<8x32xf32>
    %180 = vector.extract_strided_slice %175 {offsets = [0, 96], sizes = [8, 32], strides = [1, 1]} : vector<8x128xf32> to vector<8x32xf32>
    %181 = arith.mulf %178, %167 : vector<8x32xf32>
    %182 = arith.mulf %177, %179 : vector<8x32xf32>
    %183 = arith.addf %181, %182 : vector<8x32xf32>
    %184 = math.tanh %183 : vector<8x32xf32>
    %185 = arith.mulf %180, %184 : vector<8x32xf32>
    %186 = vector.extract_strided_slice %165 {offsets = [8, 0], sizes = [8, 128], strides = [1, 1]} : vector<64x128xf32> to vector<8x128xf32>
    %cst_41 = arith.constant dense<0.000000e+00> : vector<8x128xf32>
    %187 = tpu.matmul %185, %160, %cst_41 {dimension_numbers = #tpu.dot_dimension_numbers<[1], [0], [0], [1], [0, 0, 1, 1], [], []>} : vector<8x32xf32>, vector<32x128xf32>, vector<8x128xf32> -> vector<8x128xf32>
    %188 = arith.addf %186, %187 : vector<8x128xf32>
    %189 = arith.negf %188 : vector<8x128xf32>
    %190 = math.exp %189 : vector<8x128xf32>
    %cst_42 = arith.constant 1.000000e+00 : f32
    %191 = vector.broadcast %cst_42 : f32 to vector<8x128xf32>
    %192 = arith.addf %191, %190 : vector<8x128xf32>
    %193 = arith.divf %191, %192 : vector<8x128xf32>
    %194 = math.tanh %188 : vector<8x128xf32>
    %195 = vector.extract_strided_slice %193 {offsets = [0, 0], sizes = [8, 32], strides = [1, 1]} : vector<8x128xf32> to vector<8x32xf32>
    %196 = vector.extract_strided_slice %193 {offsets = [0, 32], sizes = [8, 32], strides = [1, 1]} : vector<8x128xf32> to vector<8x32xf32>
    %197 = vector.extract_strided_slice %194 {offsets = [0, 64], sizes = [8, 32], strides = [1, 1]} : vector<8x128xf32> to vector<8x32xf32>
    %198 = vector.extract_strided_slice %193 {offsets = [0, 96], sizes = [8, 32], strides = [1, 1]} : vector<8x128xf32> to vector<8x32xf32>
    %199 = arith.mulf %196, %183 : vector<8x32xf32>
    %200 = arith.mulf %195, %197 : vector<8x32xf32>
    %201 = arith.addf %199, %200 : vector<8x32xf32>
    %202 = math.tanh %201 : vector<8x32xf32>
    %203 = arith.mulf %198, %202 : vector<8x32xf32>
    %204 = vector.extract_strided_slice %165 {offsets = [16, 0], sizes = [8, 128], strides = [1, 1]} : vector<64x128xf32> to vector<8x128xf32>
    %cst_43 = arith.constant dense<0.000000e+00> : vector<8x128xf32>
    %205 = tpu.matmul %203, %160, %cst_43 {dimension_numbers = #tpu.dot_dimension_numbers<[1], [0], [0], [1], [0, 0, 1, 1], [], []>} : vector<8x32xf32>, vector<32x128xf32>, vector<8x128xf32> -> vector<8x128xf32>
    %206 = arith.addf %204, %205 : vector<8x128xf32>
    %207 = arith.negf %206 : vector<8x128xf32>
    %208 = math.exp %207 : vector<8x128xf32>
    %cst_44 = arith.constant 1.000000e+00 : f32
    %209 = vector.broadcast %cst_44 : f32 to vector<8x128xf32>
    %210 = arith.addf %209, %208 : vector<8x128xf32>
    %211 = arith.divf %209, %210 : vector<8x128xf32>
    %212 = math.tanh %206 : vector<8x128xf32>
    %213 = vector.extract_strided_slice %211 {offsets = [0, 0], sizes = [8, 32], strides = [1, 1]} : vector<8x128xf32> to vector<8x32xf32>
    %214 = vector.extract_strided_slice %211 {offsets = [0, 32], sizes = [8, 32], strides = [1, 1]} : vector<8x128xf32> to vector<8x32xf32>
    %215 = vector.extract_strided_slice %212 {offsets = [0, 64], sizes = [8, 32], strides = [1, 1]} : vector<8x128xf32> to vector<8x32xf32>
    %216 = vector.extract_strided_slice %211 {offsets = [0, 96], sizes = [8, 32], strides = [1, 1]} : vector<8x128xf32> to vector<8x32xf32>
    %217 = arith.mulf %214, %201 : vector<8x32xf32>
    %218 = arith.mulf %213, %215 : vector<8x32xf32>
    %219 = arith.addf %217, %218 : vector<8x32xf32>
    %220 = math.tanh %219 : vector<8x32xf32>
    %221 = arith.mulf %216, %220 : vector<8x32xf32>
    %222 = vector.extract_strided_slice %165 {offsets = [24, 0], sizes = [8, 128], strides = [1, 1]} : vector<64x128xf32> to vector<8x128xf32>
    %cst_45 = arith.constant dense<0.000000e+00> : vector<8x128xf32>
    %223 = tpu.matmul %221, %160, %cst_45 {dimension_numbers = #tpu.dot_dimension_numbers<[1], [0], [0], [1], [0, 0, 1, 1], [], []>} : vector<8x32xf32>, vector<32x128xf32>, vector<8x128xf32> -> vector<8x128xf32>
    %224 = arith.addf %222, %223 : vector<8x128xf32>
    %225 = arith.negf %224 : vector<8x128xf32>
    %226 = math.exp %225 : vector<8x128xf32>
    %cst_46 = arith.constant 1.000000e+00 : f32
    %227 = vector.broadcast %cst_46 : f32 to vector<8x128xf32>
    %228 = arith.addf %227, %226 : vector<8x128xf32>
    %229 = arith.divf %227, %228 : vector<8x128xf32>
    %230 = math.tanh %224 : vector<8x128xf32>
    %231 = vector.extract_strided_slice %229 {offsets = [0, 0], sizes = [8, 32], strides = [1, 1]} : vector<8x128xf32> to vector<8x32xf32>
    %232 = vector.extract_strided_slice %229 {offsets = [0, 32], sizes = [8, 32], strides = [1, 1]} : vector<8x128xf32> to vector<8x32xf32>
    %233 = vector.extract_strided_slice %230 {offsets = [0, 64], sizes = [8, 32], strides = [1, 1]} : vector<8x128xf32> to vector<8x32xf32>
    %234 = vector.extract_strided_slice %229 {offsets = [0, 96], sizes = [8, 32], strides = [1, 1]} : vector<8x128xf32> to vector<8x32xf32>
    %235 = arith.mulf %232, %219 : vector<8x32xf32>
    %236 = arith.mulf %231, %233 : vector<8x32xf32>
    %237 = arith.addf %235, %236 : vector<8x32xf32>
    %238 = math.tanh %237 : vector<8x32xf32>
    %239 = arith.mulf %234, %238 : vector<8x32xf32>
    %240 = vector.extract_strided_slice %165 {offsets = [32, 0], sizes = [8, 128], strides = [1, 1]} : vector<64x128xf32> to vector<8x128xf32>
    %cst_47 = arith.constant dense<0.000000e+00> : vector<8x128xf32>
    %241 = tpu.matmul %239, %160, %cst_47 {dimension_numbers = #tpu.dot_dimension_numbers<[1], [0], [0], [1], [0, 0, 1, 1], [], []>} : vector<8x32xf32>, vector<32x128xf32>, vector<8x128xf32> -> vector<8x128xf32>
    %242 = arith.addf %240, %241 : vector<8x128xf32>
    %243 = arith.negf %242 : vector<8x128xf32>
    %244 = math.exp %243 : vector<8x128xf32>
    %cst_48 = arith.constant 1.000000e+00 : f32
    %245 = vector.broadcast %cst_48 : f32 to vector<8x128xf32>
    %246 = arith.addf %245, %244 : vector<8x128xf32>
    %247 = arith.divf %245, %246 : vector<8x128xf32>
    %248 = math.tanh %242 : vector<8x128xf32>
    %249 = vector.extract_strided_slice %247 {offsets = [0, 0], sizes = [8, 32], strides = [1, 1]} : vector<8x128xf32> to vector<8x32xf32>
    %250 = vector.extract_strided_slice %247 {offsets = [0, 32], sizes = [8, 32], strides = [1, 1]} : vector<8x128xf32> to vector<8x32xf32>
    %251 = vector.extract_strided_slice %248 {offsets = [0, 64], sizes = [8, 32], strides = [1, 1]} : vector<8x128xf32> to vector<8x32xf32>
    %252 = vector.extract_strided_slice %247 {offsets = [0, 96], sizes = [8, 32], strides = [1, 1]} : vector<8x128xf32> to vector<8x32xf32>
    %253 = arith.mulf %250, %237 : vector<8x32xf32>
    %254 = arith.mulf %249, %251 : vector<8x32xf32>
    %255 = arith.addf %253, %254 : vector<8x32xf32>
    %256 = math.tanh %255 : vector<8x32xf32>
    %257 = arith.mulf %252, %256 : vector<8x32xf32>
    %258 = vector.extract_strided_slice %165 {offsets = [40, 0], sizes = [8, 128], strides = [1, 1]} : vector<64x128xf32> to vector<8x128xf32>
    %cst_49 = arith.constant dense<0.000000e+00> : vector<8x128xf32>
    %259 = tpu.matmul %257, %160, %cst_49 {dimension_numbers = #tpu.dot_dimension_numbers<[1], [0], [0], [1], [0, 0, 1, 1], [], []>} : vector<8x32xf32>, vector<32x128xf32>, vector<8x128xf32> -> vector<8x128xf32>
    %260 = arith.addf %258, %259 : vector<8x128xf32>
    %261 = arith.negf %260 : vector<8x128xf32>
    %262 = math.exp %261 : vector<8x128xf32>
    %cst_50 = arith.constant 1.000000e+00 : f32
    %263 = vector.broadcast %cst_50 : f32 to vector<8x128xf32>
    %264 = arith.addf %263, %262 : vector<8x128xf32>
    %265 = arith.divf %263, %264 : vector<8x128xf32>
    %266 = math.tanh %260 : vector<8x128xf32>
    %267 = vector.extract_strided_slice %265 {offsets = [0, 0], sizes = [8, 32], strides = [1, 1]} : vector<8x128xf32> to vector<8x32xf32>
    %268 = vector.extract_strided_slice %265 {offsets = [0, 32], sizes = [8, 32], strides = [1, 1]} : vector<8x128xf32> to vector<8x32xf32>
    %269 = vector.extract_strided_slice %266 {offsets = [0, 64], sizes = [8, 32], strides = [1, 1]} : vector<8x128xf32> to vector<8x32xf32>
    %270 = vector.extract_strided_slice %265 {offsets = [0, 96], sizes = [8, 32], strides = [1, 1]} : vector<8x128xf32> to vector<8x32xf32>
    %271 = arith.mulf %268, %255 : vector<8x32xf32>
    %272 = arith.mulf %267, %269 : vector<8x32xf32>
    %273 = arith.addf %271, %272 : vector<8x32xf32>
    %274 = math.tanh %273 : vector<8x32xf32>
    %275 = arith.mulf %270, %274 : vector<8x32xf32>
    %276 = vector.extract_strided_slice %165 {offsets = [48, 0], sizes = [8, 128], strides = [1, 1]} : vector<64x128xf32> to vector<8x128xf32>
    %cst_51 = arith.constant dense<0.000000e+00> : vector<8x128xf32>
    %277 = tpu.matmul %275, %160, %cst_51 {dimension_numbers = #tpu.dot_dimension_numbers<[1], [0], [0], [1], [0, 0, 1, 1], [], []>} : vector<8x32xf32>, vector<32x128xf32>, vector<8x128xf32> -> vector<8x128xf32>
    %278 = arith.addf %276, %277 : vector<8x128xf32>
    %279 = arith.negf %278 : vector<8x128xf32>
    %280 = math.exp %279 : vector<8x128xf32>
    %cst_52 = arith.constant 1.000000e+00 : f32
    %281 = vector.broadcast %cst_52 : f32 to vector<8x128xf32>
    %282 = arith.addf %281, %280 : vector<8x128xf32>
    %283 = arith.divf %281, %282 : vector<8x128xf32>
    %284 = math.tanh %278 : vector<8x128xf32>
    %285 = vector.extract_strided_slice %283 {offsets = [0, 0], sizes = [8, 32], strides = [1, 1]} : vector<8x128xf32> to vector<8x32xf32>
    %286 = vector.extract_strided_slice %283 {offsets = [0, 32], sizes = [8, 32], strides = [1, 1]} : vector<8x128xf32> to vector<8x32xf32>
    %287 = vector.extract_strided_slice %284 {offsets = [0, 64], sizes = [8, 32], strides = [1, 1]} : vector<8x128xf32> to vector<8x32xf32>
    %288 = vector.extract_strided_slice %283 {offsets = [0, 96], sizes = [8, 32], strides = [1, 1]} : vector<8x128xf32> to vector<8x32xf32>
    %289 = arith.mulf %286, %273 : vector<8x32xf32>
    %290 = arith.mulf %285, %287 : vector<8x32xf32>
    %291 = arith.addf %289, %290 : vector<8x32xf32>
    %292 = math.tanh %291 : vector<8x32xf32>
    %293 = arith.mulf %288, %292 : vector<8x32xf32>
    %294 = vector.extract_strided_slice %165 {offsets = [56, 0], sizes = [8, 128], strides = [1, 1]} : vector<64x128xf32> to vector<8x128xf32>
    %cst_53 = arith.constant dense<0.000000e+00> : vector<8x128xf32>
    %295 = tpu.matmul %293, %160, %cst_53 {dimension_numbers = #tpu.dot_dimension_numbers<[1], [0], [0], [1], [0, 0, 1, 1], [], []>} : vector<8x32xf32>, vector<32x128xf32>, vector<8x128xf32> -> vector<8x128xf32>
    %296 = arith.addf %294, %295 : vector<8x128xf32>
    %297 = arith.negf %296 : vector<8x128xf32>
    %298 = math.exp %297 : vector<8x128xf32>
    %cst_54 = arith.constant 1.000000e+00 : f32
    %299 = vector.broadcast %cst_54 : f32 to vector<8x128xf32>
    %300 = arith.addf %299, %298 : vector<8x128xf32>
    %301 = arith.divf %299, %300 : vector<8x128xf32>
    %302 = math.tanh %296 : vector<8x128xf32>
    %303 = vector.extract_strided_slice %301 {offsets = [0, 0], sizes = [8, 32], strides = [1, 1]} : vector<8x128xf32> to vector<8x32xf32>
    %304 = vector.extract_strided_slice %301 {offsets = [0, 32], sizes = [8, 32], strides = [1, 1]} : vector<8x128xf32> to vector<8x32xf32>
    %305 = vector.extract_strided_slice %302 {offsets = [0, 64], sizes = [8, 32], strides = [1, 1]} : vector<8x128xf32> to vector<8x32xf32>
    %306 = vector.extract_strided_slice %301 {offsets = [0, 96], sizes = [8, 32], strides = [1, 1]} : vector<8x128xf32> to vector<8x32xf32>
    %307 = arith.mulf %304, %291 : vector<8x32xf32>
    %308 = arith.mulf %303, %305 : vector<8x32xf32>
    %309 = arith.addf %307, %308 : vector<8x32xf32>
    %310 = math.tanh %309 : vector<8x32xf32>
    %311 = arith.mulf %306, %310 : vector<8x32xf32>
    %c0_55 = arith.constant 0 : index
    %c0_56 = arith.constant 0 : index
    %312 = vector.load %arg4[%c0_55, %c0_56] : memref<32x128xf32, #tpu.memory_space<vmem>>, vector<32x128xf32>
    %cst_57 = arith.constant dense<0.000000e+00> : vector<8x128xf32>
    %313 = tpu.matmul %311, %312, %cst_57 {dimension_numbers = #tpu.dot_dimension_numbers<[1], [0], [0], [1], [0, 0, 1, 1], [], []>} : vector<8x32xf32>, vector<32x128xf32>, vector<8x128xf32> -> vector<8x128xf32>
    %c0_58 = arith.constant 0 : index
    %c0_59 = arith.constant 0 : index
    %314 = vector.load %arg5[%c0_58, %c0_59] : memref<1x128xf32, #tpu.memory_space<vmem>>, vector<1x128xf32>
    %315 = vector.broadcast %314 : vector<1x128xf32> to vector<8x128xf32>
    %316 = arith.addf %313, %315 : vector<8x128xf32>
    %c0_60 = arith.constant 0 : index
    %c0_61 = arith.constant 0 : index
    %317 = vector.load %arg6[%c0_60, %c0_61] : memref<8x128xf32, #tpu.memory_space<vmem>>, vector<8x128xf32>
    tpu.vector_store %arg6[%c0_60, %c0_61], %316 {strides = array<i32>} : memref<8x128xf32, #tpu.memory_space<vmem>>, vector<8x128xf32>,
    return
  }
}

</mosaic_0001>

<llo_original>
// kernel: lstm_model_forward.1
$region0: #{lstm_model_forward.1}
  #allocation0 [shape = 'u32[]', space=smem, size = 0x4, offset = 0x4, fixed_abs, tag = 'smem constant byte address 0x4 - core index']
  #allocation1 [shape = 'u32[72,128]{1,0:T(1,128)}', space=vmem, size = 0x9000, scoped, tag = 'internal scratch']
  %s0 = inlined_call_operand.vmem [shape: f32[64,32], index: 0, kind: input, shape index: {}]
  %s1 = inlined_call_operand.vmem [shape: f32[2,32,128], index: 1, kind: input, shape index: {}]
  %s2 = inlined_call_operand.hbm [shape: f32[2,32,128], index: 2, kind: input, shape index: {}]
  %s3 = inlined_call_operand.vmem [shape: f32[2,1,128], index: 3, kind: input, shape index: {}]
  %s4 = inlined_call_operand.vmem [shape: f32[32,128], index: 4, kind: input, shape index: {}]
  %s5 = inlined_call_operand.vmem [shape: f32[1,128], index: 5, kind: input, shape index: {}]
  %s6 = inlined_call_operand.vmem [shape: f32[8,128], index: 6, kind: output, shape index: {}]
  %s7 = sld [smem:[#allocation0]]
  $region38: #{lstm_model_forward.1} parent=0
    _
  %s9 = ssub.s32 1, %s7
  %s10 = scalar_select 0, %s9, %s7
  $region1: #{lstm_model_forward.1} parent=0
    #allocation2 [shape = 'u8[32768]{0}', space=vmem, size = 0x8000, scoped, tag = 'input window, operand 2, single buffered']
    #allocation3 [shape = 's32[1]{0}', space=sflag, size = 0x4, scoped, tag = 'scoped memory for lstm_model_forward.1']
    %11 = vsyncpa [#allocation3], 0
    // Predicated region
    $region2: #{lstm_model_forward.1} parent=1 // pred_check
      _
    $region3: #{lstm_model_forward.1} parent=1 // pred_check_branch
      %13 = sbr.rel (0) target = $region5
    $region4: #{lstm_model_forward.1} parent=1 // pred_region
      _
    $region5: #{lstm_model_forward.1} parent=1 // pred_fallthru
      _
    // Predicated region
    $region6: #{lstm_model_forward.1} parent=1 // pred_check
      _
    $region7: #{lstm_model_forward.1} parent=1 // pred_check_branch
      %15 = sbr.rel (0) target = $region9
    $region8: #{lstm_model_forward.1} parent=1 // pred_region
      _
    $region9: #{lstm_model_forward.1} parent=1 // pred_fallthru
      _
    // Predicated region
    $region10: #{lstm_model_forward.1} parent=1 // pred_check
      _
    $region11: #{lstm_model_forward.1} parent=1 // pred_check_branch
      %17 = sbr.rel (0) target = $region13
    $region12: #{lstm_model_forward.1} parent=1 // pred_region
      %19 = vsyncadd [#allocation3], 0
      %s20 = sshll.u32 %s2, 4
      %s21 = int_to_ptr.hbm [resolvable:$true] %s20
      %s22 = sshll.u32 [#allocation2], 4
      %s23 = int_to_ptr.vmem [resolvable:$true] %s22
      %28 = dma.hbm_to_vmem [thread:$0]  %s21, 1024, %s23, [#allocation3], 128, 128, 8
    $region13: #{lstm_model_forward.1} parent=1 // pred_fallthru
      _
    // Predicated region
    $region14: #{lstm_model_forward.1} parent=1 // pred_check
      _
    $region15: #{lstm_model_forward.1} parent=1 // pred_check_branch
      %30 = sbr.rel (0) target = $region17
    $region16: #{lstm_model_forward.1} parent=1 // pred_region
      _
    $region17: #{lstm_model_forward.1} parent=1 // pred_fallthru
      _
    // Predicated region
    $region18: #{lstm_model_forward.1} parent=1 // pred_check
      _
    $region19: #{lstm_model_forward.1} parent=1 // pred_check_branch
      %32 = sbr.rel (0) target = $region21
    $region20: #{lstm_model_forward.1} parent=1 // pred_region
      _
    $region21: #{lstm_model_forward.1} parent=1 // pred_fallthru
      _
    // Predicated region
    $region22: #{lstm_model_forward.1} parent=1 // pred_check
      _
    $region23: #{lstm_model_forward.1} parent=1 // pred_check_branch
      %34 = sbr.rel (0) target = $region25
    $region24: #{lstm_model_forward.1} parent=1 // pred_region
      _
    $region25: #{lstm_model_forward.1} parent=1 // pred_fallthru
      _
    // Predicated region
    $region26: #{lstm_model_forward.1} parent=1 // pred_check
      _
    $region27: #{lstm_model_forward.1} parent=1 // pred_check_branch
      %36 = sbr.rel (0) target = $region29
    $region28: #{lstm_model_forward.1} parent=1 // pred_region
      %38 = dma.done [#allocation3], 1024
    $region29: #{lstm_model_forward.1} parent=1 // pred_fallthru
      _
    %v39 = vld [vmem:[%s0] sm:$0xff]
    %v40 = vld [vmem:[%s0 + $0x8] sm:$0xff]
    %v41 = vld [vmem:[%s0 + $0x10] sm:$0xff]
    %v42 = vld [vmem:[%s0 + $0x18] sm:$0xff]
    %v43 = vld [vmem:[%s0 + $0x20] sm:$0xff]
    %v44 = vld [vmem:[%s0 + $0x28] sm:$0xff]
    %v45 = vld [vmem:[%s0 + $0x30] sm:$0xff]
    %v46 = vld [vmem:[%s0 + $0x38] sm:$0xff]
    %v47 = vld [vmem:[%s1] sm:$0xff]
    %v48 = vld [vmem:[%s1 + $0x8] sm:$0xff]
    %v49 = vld [vmem:[%s1 + $0x10] sm:$0xff]
    %v50 = vld [vmem:[%s1 + $0x18] sm:$0xff]
    %v51 = vld [vmem:[#allocation2] sm:$0xff]
    %v52 = vld [vmem:[#allocation2 + $0x8] sm:$0xff]
    %v53 = vld [vmem:[#allocation2 + $0x10] sm:$0xff]
    %v54 = vld [vmem:[#allocation2 + $0x18] sm:$0xff]
    %v55 = vld [vmem:[%s3] sm:$0x1]
    %v57 = vperm.slane %v55, 0
    %vm59 = vcmask 261120
    %v61 = vsel %vm59, %v39, 0
    %v64 = vsel %vm59, %v40, 0
    %v67 = vsel %vm59, %v41, 0
    %v70 = vsel %vm59, %v42, 0
    %v73 = vsel %vm59, %v43, 0
    %v76 = vsel %vm59, %v44, 0
    %v79 = vsel %vm59, %v45, 0
    %v82 = vsel %vm59, %v46, 0
    %84 = vmatpush.msra.mxu0 0.0
    %85 = vmatpush.msra.mxu0 0.0
    %86 = vmatpush.msra.mxu0 0.0
    %87 = vmatpush.msra.mxu0 0.0
    %88 = vmatpush.msra.mxu0 0.0
    %89 = vmatpush.msra.mxu0 0.0
    %90 = vmatpush.msra.mxu0 0.0
    %91 = vmatpush.msra.mxu0 0.0
    %92 = vmatpush.msra.mxu0 0.0
    %93 = vmatpush.msra.mxu0 0.0
    %94 = vmatpush.msra.mxu0 0.0
    %95 = vmatpush.msra.mxu0 0.0
    %96 = vmatpush.msra.mxu0 %v50
    %97 = vmatpush.msra.mxu0 %v49
    %98 = vmatpush.msra.mxu0 %v48
    %99 = vmatpush.msra.mxu0 %v47
    %100 = vmatmul.f32.gmra.mxu0 %v61
    %v101 = vpop.f32.mrf.mxu0
    %v102 = vadd.f32 %v57, %v101
    %103 = vmatmul.f32.gmra.mxu0 %v64
    %v104 = vpop.f32.mrf.mxu0
    %v105 = vadd.f32 %v57, %v104
    %106 = vmatmul.f32.gmra.mxu0 %v67
    %v107 = vpop.f32.mrf.mxu0
    %v108 = vadd.f32 %v57, %v107
    %109 = vmatmul.f32.gmra.mxu0 %v70
    %v110 = vpop.f32.mrf.mxu0
    %v111 = vadd.f32 %v57, %v110
    %112 = vmatmul.f32.gmra.mxu0 %v73
    %v113 = vpop.f32.mrf.mxu0
    %v114 = vadd.f32 %v57, %v113
    %115 = vmatmul.f32.gmra.mxu0 %v76
    %v116 = vpop.f32.mrf.mxu0
    %v117 = vadd.f32 %v57, %v116
    %118 = vmatmul.f32.gmra.mxu0 %v79
    %v119 = vpop.f32.mrf.mxu0
    %v120 = vadd.f32 %v57, %v119
    %121 = vmatmul.f32.gmra.mxu0 %v82
    %v122 = vpop.f32.mrf.mxu0
    %v123 = vadd.f32 %v57, %v122
    %124 = vdwg.mxu0
    %v126 = vsel %vm59, 0.0, 0
    %128 = vmatpush.msra.mxu0 0.0
    %129 = vmatpush.msra.mxu0 0.0
    %130 = vmatpush.msra.mxu0 0.0
    %131 = vmatpush.msra.mxu0 0.0
    %132 = vmatpush.msra.mxu0 0.0
    %133 = vmatpush.msra.mxu0 0.0
    %134 = vmatpush.msra.mxu0 0.0
    %135 = vmatpush.msra.mxu0 0.0
    %136 = vmatpush.msra.mxu0 0.0
    %137 = vmatpush.msra.mxu0 0.0
    %138 = vmatpush.msra.mxu0 0.0
    %139 = vmatpush.msra.mxu0 0.0
    %140 = vmatpush.msra.mxu0 %v54
    %141 = vmatpush.msra.mxu0 %v53
    %142 = vmatpush.msra.mxu0 %v52
    %143 = vmatpush.msra.mxu0 %v51
    %144 = vmatmul.f32.gmra.mxu0 %v126
    %v145 = vpop.f32.mrf.mxu0
    %v146 = vadd.f32 0.0, %v145
    %147 = vdwg.mxu0
    %v148 = vadd.f32 %v102, %v146
    %v149 = vxor.u32 %v148, 2147483648
    %v150 = vmul.f32 %v149, 1.442695
    %v151 = vpow.pop %v150
    %v152 = vadd.f32 %v151, 1.0
    %v153 = vrcp.pop %v152
    %v154 = vmul.f32 %v152, %v153
    %v155 = vsub.f32 1.0, %v154
    %v156 = vmul.f32 %v153, %v155
    %v157 = vadd.f32 %v153, %v156
    %vm158 = vweird.f32 %v152
    %vm159 = vweird.f32 %v153
    %vm160 = vmor %vm158, %vm159
    %v161 = vsel %vm160, %v153, %v157
    %v162 = vand.u32 2147483647, %v152
    %vm163 = vcmp.eq.f32.partialorder %v162, 8.507059e+37
    %v164 = vand.u32 %v152, 2147483648
    %v165 = vor.u32 1.1754944e-38, %v164
    %v166 = vsel %vm163, %v165, %v161
    %v167 = vmul.f32 1.0, %v166
    %v168 = vtanh.pop %v148
    %v169 = vmul.f32 %v167, 0.0
    %171 = vrot.lane.b32.xlu0 %v168, 64
    %v172 = vpop.permute.xlu0 %171
    %v174 = vmul.f32 %v167, %v172
    %176 = vrot.lane.b32.xlu0 %v174, 32
    %v177 = vpop.permute.xlu0 %176
    %v179 = vadd.f32 %v169, %v177
    %v180 = vtanh.pop %v179
    %182 = vrot.lane.b32.xlu0 %v180, 64
    %v183 = vpop.permute.xlu0 %182
    %v185 = vmul.f32 %v167, %v183
    %187 = vrot.lane.b32.xlu0 %v185, 32
    %v188 = vpop.permute.xlu0 %187
    %v189 = vsel %vm59, %v188, 0
    %191 = vmatpush.msra.mxu0 0.0
    %192 = vmatpush.msra.mxu0 0.0
    %193 = vmatpush.msra.mxu0 0.0
    %194 = vmatpush.msra.mxu0 0.0
    %195 = vmatpush.msra.mxu0 0.0
    %196 = vmatpush.msra.mxu0 0.0
    %197 = vmatpush.msra.mxu0 0.0
    %198 = vmatpush.msra.mxu0 0.0
    %199 = vmatpush.msra.mxu0 0.0
    %200 = vmatpush.msra.mxu0 0.0
    %201 = vmatpush.msra.mxu0 0.0
    %202 = vmatpush.msra.mxu0 0.0
    %203 = vmatpush.msra.mxu0 %v54
    %204 = vmatpush.msra.mxu0 %v53
    %205 = vmatpush.msra.mxu0 %v52
    %206 = vmatpush.msra.mxu0 %v51
    %207 = vmatmul.f32.gmra.mxu0 %v189
    %v208 = vpop.f32.mrf.mxu0
    %v209 = vadd.f32 0.0, %v208
    %210 = vdwg.mxu0
    %v211 = vadd.f32 %v105, %v209
    %v212 = vxor.u32 %v211, 2147483648
    %v213 = vmul.f32 %v212, 1.442695
    %v214 = vpow.pop %v213
    %v215 = vadd.f32 %v214, 1.0
    %v216 = vrcp.pop %v215
    %v217 = vmul.f32 %v215, %v216
    %v218 = vsub.f32 1.0, %v217
    %v219 = vmul.f32 %v216, %v218
    %v220 = vadd.f32 %v216, %v219
    %vm221 = vweird.f32 %v215
    %vm222 = vweird.f32 %v216
    %vm223 = vmor %vm221, %vm222
    %v224 = vsel %vm223, %v216, %v220
    %v225 = vand.u32 2147483647, %v215
    %vm226 = vcmp.eq.f32.partialorder %v225, 8.507059e+37
    %v227 = vand.u32 %v215, 2147483648
    %v228 = vor.u32 1.1754944e-38, %v227
    %v229 = vsel %vm226, %v228, %v224
    %v230 = vmul.f32 1.0, %v229
    %v231 = vtanh.pop %v211
    %v232 = vmul.f32 %v230, %v179
    %234 = vrot.lane.b32.xlu0 %v231, 64
    %v235 = vpop.permute.xlu0 %234
    %v237 = vmul.f32 %v230, %v235
    %239 = vrot.lane.b32.xlu0 %v237, 32
    %v240 = vpop.permute.xlu0 %239
    %v242 = vadd.f32 %v232, %v240
    %v243 = vtanh.pop %v242
    %245 = vrot.lane.b32.xlu0 %v243, 64
    %v246 = vpop.permute.xlu0 %245
    %v248 = vmul.f32 %v230, %v246
    %250 = vrot.lane.b32.xlu0 %v248, 32
    %v251 = vpop.permute.xlu0 %250
    %v252 = vsel %vm59, %v251, 0
    %254 = vmatpush.msra.mxu0 0.0
    %255 = vmatpush.msra.mxu0 0.0
    %256 = vmatpush.msra.mxu0 0.0
    %257 = vmatpush.msra.mxu0 0.0
    %258 = vmatpush.msra.mxu0 0.0
    %259 = vmatpush.msra.mxu0 0.0
    %260 = vmatpush.msra.mxu0 0.0
    %261 = vmatpush.msra.mxu0 0.0
    %262 = vmatpush.msra.mxu0 0.0
    %263 = vmatpush.msra.mxu0 0.0
    %264 = vmatpush.msra.mxu0 0.0
    %265 = vmatpush.msra.mxu0 0.0
    %266 = vmatpush.msra.mxu0 %v54
    %267 = vmatpush.msra.mxu0 %v53
    %268 = vmatpush.msra.mxu0 %v52
    %269 = vmatpush.msra.mxu0 %v51
    %270 = vmatmul.f32.gmra.mxu0 %v252
    %v271 = vpop.f32.mrf.mxu0
    %v272 = vadd.f32 0.0, %v271
    %273 = vdwg.mxu0
    %v274 = vadd.f32 %v108, %v272
    %v275 = vxor.u32 %v274, 2147483648
    %v276 = vmul.f32 %v275, 1.442695
    %v277 = vpow.pop %v276
    %v278 = vadd.f32 %v277, 1.0
    %v279 = vrcp.pop %v278
    %v280 = vmul.f32 %v278, %v279
    %v281 = vsub.f32 1.0, %v280
    %v282 = vmul.f32 %v279, %v281
    %v283 = vadd.f32 %v279, %v282
    %vm284 = vweird.f32 %v278
    %vm285 = vweird.f32 %v279
    %vm286 = vmor %vm284, %vm285
    %v287 = vsel %vm286, %v279, %v283
    %v288 = vand.u32 2147483647, %v278
    %vm289 = vcmp.eq.f32.partialorder %v288, 8.507059e+37
    %v290 = vand.u32 %v278, 2147483648
    %v291 = vor.u32 1.1754944e-38, %v290
    %v292 = vsel %vm289, %v291, %v287
    %v293 = vmul.f32 1.0, %v292
    %v294 = vtanh.pop %v274
    %v295 = vmul.f32 %v293, %v242
    %297 = vrot.lane.b32.xlu0 %v294, 64
    %v298 = vpop.permute.xlu0 %297
    %v300 = vmul.f32 %v293, %v298
    %302 = vrot.lane.b32.xlu0 %v300, 32
    %v303 = vpop.permute.xlu0 %302
    %v305 = vadd.f32 %v295, %v303
    %v306 = vtanh.pop %v305
    %308 = vrot.lane.b32.xlu0 %v306, 64
    %v309 = vpop.permute.xlu0 %308
    %v311 = vmul.f32 %v293, %v309
    %313 = vrot.lane.b32.xlu0 %v311, 32
    %v314 = vpop.permute.xlu0 %313
    %v315 = vsel %vm59, %v314, 0
    %317 = vmatpush.msra.mxu0 0.0
    %318 = vmatpush.msra.mxu0 0.0
    %319 = vmatpush.msra.mxu0 0.0
    %320 = vmatpush.msra.mxu0 0.0
    %321 = vmatpush.msra.mxu0 0.0
    %322 = vmatpush.msra.mxu0 0.0
    %323 = vmatpush.msra.mxu0 0.0
    %324 = vmatpush.msra.mxu0 0.0
    %325 = vmatpush.msra.mxu0 0.0
    %326 = vmatpush.msra.mxu0 0.0
    %327 = vmatpush.msra.mxu0 0.0
    %328 = vmatpush.msra.mxu0 0.0
    %329 = vmatpush.msra.mxu0 %v54
    %330 = vmatpush.msra.mxu0 %v53
    %331 = vmatpush.msra.mxu0 %v52
    %332 = vmatpush.msra.mxu0 %v51
    %333 = vmatmul.f32.gmra.mxu0 %v315
    %v334 = vpop.f32.mrf.mxu0
    %v335 = vadd.f32 0.0, %v334
    %336 = vdwg.mxu0
    %v337 = vadd.f32 %v111, %v335
    %v338 = vxor.u32 %v337, 2147483648
    %v339 = vmul.f32 %v338, 1.442695
    %v340 = vpow.pop %v339
    %v341 = vadd.f32 %v340, 1.0
    %v342 = vrcp.pop %v341
    %v343 = vmul.f32 %v341, %v342
    %v344 = vsub.f32 1.0, %v343
    %v345 = vmul.f32 %v342, %v344
    %v346 = vadd.f32 %v342, %v345
    %vm347 = vweird.f32 %v341
    %vm348 = vweird.f32 %v342
    %vm349 = vmor %vm347, %vm348
    %v350 = vsel %vm349, %v342, %v346
    %v351 = vand.u32 2147483647, %v341
    %vm352 = vcmp.eq.f32.partialorder %v351, 8.507059e+37
    %v353 = vand.u32 %v341, 2147483648
    %v354 = vor.u32 1.1754944e-38, %v353
    %v355 = vsel %vm352, %v354, %v350
    %v356 = vmul.f32 1.0, %v355
    %v357 = vtanh.pop %v337
    %v358 = vmul.f32 %v356, %v305
    %360 = vrot.lane.b32.xlu0 %v357, 64
    %v361 = vpop.permute.xlu0 %360
    %v363 = vmul.f32 %v356, %v361
    %365 = vrot.lane.b32.xlu0 %v363, 32
    %v366 = vpop.permute.xlu0 %365
    %v368 = vadd.f32 %v358, %v366
    %v369 = vtanh.pop %v368
    %371 = vrot.lane.b32.xlu0 %v369, 64
    %v372 = vpop.permute.xlu0 %371
    %v374 = vmul.f32 %v356, %v372
    %376 = vrot.lane.b32.xlu0 %v374, 32
    %v377 = vpop.permute.xlu0 %376
    %v378 = vsel %vm59, %v377, 0
    %380 = vmatpush.msra.mxu0 0.0
    %381 = vmatpush.msra.mxu0 0.0
    %382 = vmatpush.msra.mxu0 0.0
    %383 = vmatpush.msra.mxu0 0.0
    %384 = vmatpush.msra.mxu0 0.0
    %385 = vmatpush.msra.mxu0 0.0
    %386 = vmatpush.msra.mxu0 0.0
    %387 = vmatpush.msra.mxu0 0.0
    %388 = vmatpush.msra.mxu0 0.0
    %389 = vmatpush.msra.mxu0 0.0
    %390 = vmatpush.msra.mxu0 0.0
    %391 = vmatpush.msra.mxu0 0.0
    %392 = vmatpush.msra.mxu0 %v54
    %393 = vmatpush.msra.mxu0 %v53
    %394 = vmatpush.msra.mxu0 %v52
    %395 = vmatpush.msra.mxu0 %v51
    %396 = vmatmul.f32.gmra.mxu0 %v378
    %v397 = vpop.f32.mrf.mxu0
    %v398 = vadd.f32 0.0, %v397
    %399 = vdwg.mxu0
    %v400 = vadd.f32 %v114, %v398
    %v401 = vxor.u32 %v400, 2147483648
    %v402 = vmul.f32 %v401, 1.442695
    %v403 = vpow.pop %v402
    %v404 = vadd.f32 %v403, 1.0
    %v405 = vrcp.pop %v404
    %v406 = vmul.f32 %v404, %v405
    %v407 = vsub.f32 1.0, %v406
    %v408 = vmul.f32 %v405, %v407
    %v409 = vadd.f32 %v405, %v408
    %vm410 = vweird.f32 %v404
    %vm411 = vweird.f32 %v405
    %vm412 = vmor %vm410, %vm411
    %v413 = vsel %vm412, %v405, %v409
    %v414 = vand.u32 2147483647, %v404
    %vm415 = vcmp.eq.f32.partialorder %v414, 8.507059e+37
    %v416 = vand.u32 %v404, 2147483648
    %v417 = vor.u32 1.1754944e-38, %v416
    %v418 = vsel %vm415, %v417, %v413
    %v419 = vmul.f32 1.0, %v418
    %v420 = vtanh.pop %v400
    %v421 = vmul.f32 %v419, %v368
    %423 = vrot.lane.b32.xlu0 %v420, 64
    %v424 = vpop.permute.xlu0 %423
    %v426 = vmul.f32 %v419, %v424
    %428 = vrot.lane.b32.xlu0 %v426, 32
    %v429 = vpop.permute.xlu0 %428
    %v431 = vadd.f32 %v421, %v429
    %v432 = vtanh.pop %v431
    %434 = vrot.lane.b32.xlu0 %v432, 64
    %v435 = vpop.permute.xlu0 %434
    %v437 = vmul.f32 %v419, %v435
    %439 = vrot.lane.b32.xlu0 %v437, 32
    %v440 = vpop.permute.xlu0 %439
    %v441 = vsel %vm59, %v440, 0
    %443 = vmatpush.msra.mxu0 0.0
    %444 = vmatpush.msra.mxu0 0.0
    %445 = vmatpush.msra.mxu0 0.0
    %446 = vmatpush.msra.mxu0 0.0
    %447 = vmatpush.msra.mxu0 0.0
    %448 = vmatpush.msra.mxu0 0.0
    %449 = vmatpush.msra.mxu0 0.0
    %450 = vmatpush.msra.mxu0 0.0
    %451 = vmatpush.msra.mxu0 0.0
    %452 = vmatpush.msra.mxu0 0.0
    %453 = vmatpush.msra.mxu0 0.0
    %454 = vmatpush.msra.mxu0 0.0
    %455 = vmatpush.msra.mxu0 %v54
    %456 = vmatpush.msra.mxu0 %v53
    %457 = vmatpush.msra.mxu0 %v52
    %458 = vmatpush.msra.mxu0 %v51
    %459 = vmatmul.f32.gmra.mxu0 %v441
    %v460 = vpop.f32.mrf.mxu0
    %v461 = vadd.f32 0.0, %v460
    %462 = vdwg.mxu0
    %v463 = vadd.f32 %v117, %v461
    %v464 = vxor.u32 %v463, 2147483648
    %v465 = vmul.f32 %v464, 1.442695
    %v466 = vpow.pop %v465
    %v467 = vadd.f32 %v466, 1.0
    %v468 = vrcp.pop %v467
    %v469 = vmul.f32 %v467, %v468
    %v470 = vsub.f32 1.0, %v469
    %v471 = vmul.f32 %v468, %v470
    %v472 = vadd.f32 %v468, %v471
    %vm473 = vweird.f32 %v467
    %vm474 = vweird.f32 %v468
    %vm475 = vmor %vm473, %vm474
    %v476 = vsel %vm475, %v468, %v472
    %v477 = vand.u32 2147483647, %v467
    %vm478 = vcmp.eq.f32.partialorder %v477, 8.507059e+37
    %v479 = vand.u32 %v467, 2147483648
    %v480 = vor.u32 1.1754944e-38, %v479
    %v481 = vsel %vm478, %v480, %v476
    %v482 = vmul.f32 1.0, %v481
    %v483 = vtanh.pop %v463
    %v484 = vmul.f32 %v482, %v431
    %486 = vrot.lane.b32.xlu0 %v483, 64
    %v487 = vpop.permute.xlu0 %486
    %v489 = vmul.f32 %v482, %v487
    %491 = vrot.lane.b32.xlu0 %v489, 32
    %v492 = vpop.permute.xlu0 %491
    %v494 = vadd.f32 %v484, %v492
    %v495 = vtanh.pop %v494
    %497 = vrot.lane.b32.xlu0 %v495, 64
    %v498 = vpop.permute.xlu0 %497
    %v500 = vmul.f32 %v482, %v498
    %502 = vrot.lane.b32.xlu0 %v500, 32
    %v503 = vpop.permute.xlu0 %502
    %v504 = vsel %vm59, %v503, 0
    %506 = vmatpush.msra.mxu0 0.0
    %507 = vmatpush.msra.mxu0 0.0
    %508 = vmatpush.msra.mxu0 0.0
    %509 = vmatpush.msra.mxu0 0.0
    %510 = vmatpush.msra.mxu0 0.0
    %511 = vmatpush.msra.mxu0 0.0
    %512 = vmatpush.msra.mxu0 0.0
    %513 = vmatpush.msra.mxu0 0.0
    %514 = vmatpush.msra.mxu0 0.0
    %515 = vmatpush.msra.mxu0 0.0
    %516 = vmatpush.msra.mxu0 0.0
    %517 = vmatpush.msra.mxu0 0.0
    %518 = vmatpush.msra.mxu0 %v54
    %519 = vmatpush.msra.mxu0 %v53
    %520 = vmatpush.msra.mxu0 %v52
    %521 = vmatpush.msra.mxu0 %v51
    %522 = vmatmul.f32.gmra.mxu0 %v504
    %v523 = vpop.f32.mrf.mxu0
    %v524 = vadd.f32 0.0, %v523
    %525 = vdwg.mxu0
    %v526 = vadd.f32 %v120, %v524
    %v527 = vxor.u32 %v526, 2147483648
    %v528 = vmul.f32 %v527, 1.442695
    %v529 = vpow.pop %v528
    %v530 = vadd.f32 %v529, 1.0
    %v531 = vrcp.pop %v530
    %v532 = vmul.f32 %v530, %v531
    %v533 = vsub.f32 1.0, %v532
    %v534 = vmul.f32 %v531, %v533
    %v535 = vadd.f32 %v531, %v534
    %vm536 = vweird.f32 %v530
    %vm537 = vweird.f32 %v531
    %vm538 = vmor %vm536, %vm537
    %v539 = vsel %vm538, %v531, %v535
    %v540 = vand.u32 2147483647, %v530
    %vm541 = vcmp.eq.f32.partialorder %v540, 8.507059e+37
    %v542 = vand.u32 %v530, 2147483648
    %v543 = vor.u32 1.1754944e-38, %v542
    %v544 = vsel %vm541, %v543, %v539
    %v545 = vmul.f32 1.0, %v544
    %v546 = vtanh.pop %v526
    %v547 = vmul.f32 %v545, %v494
    %549 = vrot.lane.b32.xlu0 %v546, 64
    %v550 = vpop.permute.xlu0 %549
    %v552 = vmul.f32 %v545, %v550
    %554 = vrot.lane.b32.xlu0 %v552, 32
    %v555 = vpop.permute.xlu0 %554
    %v557 = vadd.f32 %v547, %v555
    %v558 = vtanh.pop %v557
    %560 = vrot.lane.b32.xlu0 %v558, 64
    %v561 = vpop.permute.xlu0 %560
    %v563 = vmul.f32 %v545, %v561
    %565 = vrot.lane.b32.xlu0 %v563, 32
    %v566 = vpop.permute.xlu0 %565
    %v567 = vsel %vm59, %v566, 0
    %569 = vmatpush.msra.mxu0 0.0
    %570 = vmatpush.msra.mxu0 0.0
    %571 = vmatpush.msra.mxu0 0.0
    %572 = vmatpush.msra.mxu0 0.0
    %573 = vmatpush.msra.mxu0 0.0
    %574 = vmatpush.msra.mxu0 0.0
    %575 = vmatpush.msra.mxu0 0.0
    %576 = vmatpush.msra.mxu0 0.0
    %577 = vmatpush.msra.mxu0 0.0
    %578 = vmatpush.msra.mxu0 0.0
    %579 = vmatpush.msra.mxu0 0.0
    %580 = vmatpush.msra.mxu0 0.0
    %581 = vmatpush.msra.mxu0 %v54
    %582 = vmatpush.msra.mxu0 %v53
    %583 = vmatpush.msra.mxu0 %v52
    %584 = vmatpush.msra.mxu0 %v51
    %585 = vmatmul.f32.gmra.mxu0 %v567
    %v586 = vpop.f32.mrf.mxu0
    %v587 = vadd.f32 0.0, %v586
    %588 = vdwg.mxu0
    %v589 = vadd.f32 %v123, %v587
    %v590 = vxor.u32 %v589, 2147483648
    %v591 = vmul.f32 %v590, 1.442695
    %v592 = vpow.pop %v591
    %v593 = vadd.f32 %v592, 1.0
    %v594 = vrcp.pop %v593
    %v595 = vmul.f32 %v593, %v594
    %v596 = vsub.f32 1.0, %v595
    %v597 = vmul.f32 %v594, %v596
    %v598 = vadd.f32 %v594, %v597
    %vm599 = vweird.f32 %v593
    %vm600 = vweird.f32 %v594
    %vm601 = vmor %vm599, %vm600
    %v602 = vsel %vm601, %v594, %v598
    %v603 = vand.u32 2147483647, %v593
    %vm604 = vcmp.eq.f32.partialorder %v603, 8.507059e+37
    %v605 = vand.u32 %v593, 2147483648
    %v606 = vor.u32 1.1754944e-38, %v605
    %v607 = vsel %vm604, %v606, %v602
    %v608 = vmul.f32 1.0, %v607
    %v609 = vtanh.pop %v589
    %v610 = vmul.f32 %v608, %v557
    %612 = vrot.lane.b32.xlu0 %v609, 64
    %v613 = vpop.permute.xlu0 %612
    %v615 = vmul.f32 %v608, %v613
    %617 = vrot.lane.b32.xlu0 %v615, 32
    %v618 = vpop.permute.xlu0 %617
    %v620 = vadd.f32 %v610, %v618
    %v621 = vtanh.pop %v620
    %623 = vrot.lane.b32.xlu0 %v621, 64
    %v624 = vpop.permute.xlu0 %623
    %v626 = vmul.f32 %v608, %v624
    %s627 = scalar_lea.vmem %s1, 32
    %v628 = vld [vmem:[%s627] sm:$0xff]
    %v629 = vld [vmem:[%s627 + $0x8] sm:$0xff]
    %v630 = vld [vmem:[%s627 + $0x10] sm:$0xff]
    %v631 = vld [vmem:[%s627 + $0x18] sm:$0xff]
    %s632 = scalar_lea.vmem [#allocation2], 32
    %v633 = vld [vmem:[%s632] sm:$0xff]
    %v634 = vld [vmem:[%s632 + $0x8] sm:$0xff]
    %v635 = vld [vmem:[%s632 + $0x10] sm:$0xff]
    %v636 = vld [vmem:[%s632 + $0x18] sm:$0xff]
    %s637 = scalar_lea.vmem %s3, 1
    %v638 = vld [vmem:[%s637] sm:$0x1]
    %v640 = vperm.slane %v638, 0
    %643 = vrot.lane.b32.xlu0 %v626, 32
    %v644 = vpop.permute.xlu0 %643
    %v645 = vsel %vm59, %v644, 0
    %647 = vmatpush.msra.mxu0 0.0
    %648 = vmatpush.msra.mxu0 0.0
    %649 = vmatpush.msra.mxu0 0.0
    %650 = vmatpush.msra.mxu0 0.0
    %651 = vmatpush.msra.mxu0 0.0
    %652 = vmatpush.msra.mxu0 0.0
    %653 = vmatpush.msra.mxu0 0.0
    %654 = vmatpush.msra.mxu0 0.0
    %655 = vmatpush.msra.mxu0 0.0
    %656 = vmatpush.msra.mxu0 0.0
    %657 = vmatpush.msra.mxu0 0.0
    %658 = vmatpush.msra.mxu0 0.0
    %659 = vmatpush.msra.mxu0 %v631
    %660 = vmatpush.msra.mxu0 %v630
    %661 = vmatpush.msra.mxu0 %v629
    %662 = vmatpush.msra.mxu0 %v628
    %663 = vmatmul.f32.gmra.mxu0 %v189
    %v664 = vpop.f32.mrf.mxu0
    %v665 = vadd.f32 %v640, %v664
    %666 = vmatmul.f32.gmra.mxu0 %v252
    %v667 = vpop.f32.mrf.mxu0
    %v668 = vadd.f32 %v640, %v667
    %669 = vmatmul.f32.gmra.mxu0 %v315
    %v670 = vpop.f32.mrf.mxu0
    %v671 = vadd.f32 %v640, %v670
    %672 = vmatmul.f32.gmra.mxu0 %v378
    %v673 = vpop.f32.mrf.mxu0
    %v674 = vadd.f32 %v640, %v673
    %675 = vmatmul.f32.gmra.mxu0 %v441
    %v676 = vpop.f32.mrf.mxu0
    %v677 = vadd.f32 %v640, %v676
    %678 = vmatmul.f32.gmra.mxu0 %v504
    %v679 = vpop.f32.mrf.mxu0
    %v680 = vadd.f32 %v640, %v679
    %681 = vmatmul.f32.gmra.mxu0 %v567
    %v682 = vpop.f32.mrf.mxu0
    %v683 = vadd.f32 %v640, %v682
    %684 = vmatmul.f32.gmra.mxu0 %v645
    %v685 = vpop.f32.mrf.mxu0
    %v686 = vadd.f32 %v640, %v685
    %687 = vdwg.mxu0
    %688 = vmatpush.msra.mxu0 0.0
    %689 = vmatpush.msra.mxu0 0.0
    %690 = vmatpush.msra.mxu0 0.0
    %691 = vmatpush.msra.mxu0 0.0
    %692 = vmatpush.msra.mxu0 0.0
    %693 = vmatpush.msra.mxu0 0.0
    %694 = vmatpush.msra.mxu0 0.0
    %695 = vmatpush.msra.mxu0 0.0
    %696 = vmatpush.msra.mxu0 0.0
    %697 = vmatpush.msra.mxu0 0.0
    %698 = vmatpush.msra.mxu0 0.0
    %699 = vmatpush.msra.mxu0 0.0
    %700 = vmatpush.msra.mxu0 %v636
    %701 = vmatpush.msra.mxu0 %v635
    %702 = vmatpush.msra.mxu0 %v634
    %703 = vmatpush.msra.mxu0 %v633
    %704 = vmatmul.f32.gmra.mxu0 %v126
    %v705 = vpop.f32.mrf.mxu0
    %v706 = vadd.f32 0.0, %v705
    %707 = vdwg.mxu0
    %v708 = vadd.f32 %v665, %v706
    %v709 = vxor.u32 %v708, 2147483648
    %v710 = vmul.f32 %v709, 1.442695
    %v711 = vpow.pop %v710
    %v712 = vadd.f32 %v711, 1.0
    %v713 = vrcp.pop %v712
    %v714 = vmul.f32 %v712, %v713
    %v715 = vsub.f32 1.0, %v714
    %v716 = vmul.f32 %v713, %v715
    %v717 = vadd.f32 %v713, %v716
    %vm718 = vweird.f32 %v712
    %vm719 = vweird.f32 %v713
    %vm720 = vmor %vm718, %vm719
    %v721 = vsel %vm720, %v713, %v717
    %v722 = vand.u32 2147483647, %v712
    %vm723 = vcmp.eq.f32.partialorder %v722, 8.507059e+37
    %v724 = vand.u32 %v712, 2147483648
    %v725 = vor.u32 1.1754944e-38, %v724
    %v726 = vsel %vm723, %v725, %v721
    %v727 = vmul.f32 1.0, %v726
    %v728 = vtanh.pop %v708
    %v729 = vmul.f32 %v727, 0.0
    %731 = vrot.lane.b32.xlu0 %v728, 64
    %v732 = vpop.permute.xlu0 %731
    %v734 = vmul.f32 %v727, %v732
    %736 = vrot.lane.b32.xlu0 %v734, 32
    %v737 = vpop.permute.xlu0 %736
    %v739 = vadd.f32 %v729, %v737
    %v740 = vtanh.pop %v739
    %742 = vrot.lane.b32.xlu0 %v740, 64
    %v743 = vpop.permute.xlu0 %742
    %v745 = vmul.f32 %v727, %v743
    %747 = vrot.lane.b32.xlu0 %v745, 32
    %v748 = vpop.permute.xlu0 %747
    %v749 = vsel %vm59, %v748, 0
    %751 = vmatpush.msra.mxu0 0.0
    %752 = vmatpush.msra.mxu0 0.0
    %753 = vmatpush.msra.mxu0 0.0
    %754 = vmatpush.msra.mxu0 0.0
    %755 = vmatpush.msra.mxu0 0.0
    %756 = vmatpush.msra.mxu0 0.0
    %757 = vmatpush.msra.mxu0 0.0
    %758 = vmatpush.msra.mxu0 0.0
    %759 = vmatpush.msra.mxu0 0.0
    %760 = vmatpush.msra.mxu0 0.0
    %761 = vmatpush.msra.mxu0 0.0
    %762 = vmatpush.msra.mxu0 0.0
    %763 = vmatpush.msra.mxu0 %v636
    %764 = vmatpush.msra.mxu0 %v635
    %765 = vmatpush.msra.mxu0 %v634
    %766 = vmatpush.msra.mxu0 %v633
    %767 = vmatmul.f32.gmra.mxu0 %v749
    %v768 = vpop.f32.mrf.mxu0
    %v769 = vadd.f32 0.0, %v768
    %770 = vdwg.mxu0
    %v771 = vadd.f32 %v668, %v769
    %v772 = vxor.u32 %v771, 2147483648
    %v773 = vmul.f32 %v772, 1.442695
    %v774 = vpow.pop %v773
    %v775 = vadd.f32 %v774, 1.0
    %v776 = vrcp.pop %v775
    %v777 = vmul.f32 %v775, %v776
    %v778 = vsub.f32 1.0, %v777
    %v779 = vmul.f32 %v776, %v778
    %v780 = vadd.f32 %v776, %v779
    %vm781 = vweird.f32 %v775
    %vm782 = vweird.f32 %v776
    %vm783 = vmor %vm781, %vm782
    %v784 = vsel %vm783, %v776, %v780
    %v785 = vand.u32 2147483647, %v775
    %vm786 = vcmp.eq.f32.partialorder %v785, 8.507059e+37
    %v787 = vand.u32 %v775, 2147483648
    %v788 = vor.u32 1.1754944e-38, %v787
    %v789 = vsel %vm786, %v788, %v784
    %v790 = vmul.f32 1.0, %v789
    %v791 = vtanh.pop %v771
    %v792 = vmul.f32 %v790, %v739
    %794 = vrot.lane.b32.xlu0 %v791, 64
    %v795 = vpop.permute.xlu0 %794
    %v797 = vmul.f32 %v790, %v795
    %799 = vrot.lane.b32.xlu0 %v797, 32
    %v800 = vpop.permute.xlu0 %799
    %v802 = vadd.f32 %v792, %v800
    %v803 = vtanh.pop %v802
    %805 = vrot.lane.b32.xlu0 %v803, 64
    %v806 = vpop.permute.xlu0 %805
    %v808 = vmul.f32 %v790, %v806
    %810 = vrot.lane.b32.xlu0 %v808, 32
    %v811 = vpop.permute.xlu0 %810
    %v812 = vsel %vm59, %v811, 0
    %814 = vmatpush.msra.mxu0 0.0
    %815 = vmatpush.msra.mxu0 0.0
    %816 = vmatpush.msra.mxu0 0.0
    %817 = vmatpush.msra.mxu0 0.0
    %818 = vmatpush.msra.mxu0 0.0
    %819 = vmatpush.msra.mxu0 0.0
    %820 = vmatpush.msra.mxu0 0.0
    %821 = vmatpush.msra.mxu0 0.0
    %822 = vmatpush.msra.mxu0 0.0
    %823 = vmatpush.msra.mxu0 0.0
    %824 = vmatpush.msra.mxu0 0.0
    %825 = vmatpush.msra.mxu0 0.0
    %826 = vmatpush.msra.mxu0 %v636
    %827 = vmatpush.msra.mxu0 %v635
    %828 = vmatpush.msra.mxu0 %v634
    %829 = vmatpush.msra.mxu0 %v633
    %830 = vmatmul.f32.gmra.mxu0 %v812
    %v831 = vpop.f32.mrf.mxu0
    %v832 = vadd.f32 0.0, %v831
    %833 = vdwg.mxu0
    %v834 = vadd.f32 %v671, %v832
    %v835 = vxor.u32 %v834, 2147483648
    %v836 = vmul.f32 %v835, 1.442695
    %v837 = vpow.pop %v836
    %v838 = vadd.f32 %v837, 1.0
    %v839 = vrcp.pop %v838
    %v840 = vmul.f32 %v838, %v839
    %v841 = vsub.f32 1.0, %v840
    %v842 = vmul.f32 %v839, %v841
    %v843 = vadd.f32 %v839, %v842
    %vm844 = vweird.f32 %v838
    %vm845 = vweird.f32 %v839
    %vm846 = vmor %vm844, %vm845
    %v847 = vsel %vm846, %v839, %v843
    %v848 = vand.u32 2147483647, %v838
    %vm849 = vcmp.eq.f32.partialorder %v848, 8.507059e+37
    %v850 = vand.u32 %v838, 2147483648
    %v851 = vor.u32 1.1754944e-38, %v850
    %v852 = vsel %vm849, %v851, %v847
    %v853 = vmul.f32 1.0, %v852
    %v854 = vtanh.pop %v834
    %v855 = vmul.f32 %v853, %v802
    %857 = vrot.lane.b32.xlu0 %v854, 64
    %v858 = vpop.permute.xlu0 %857
    %v860 = vmul.f32 %v853, %v858
    %862 = vrot.lane.b32.xlu0 %v860, 32
    %v863 = vpop.permute.xlu0 %862
    %v865 = vadd.f32 %v855, %v863
    %v866 = vtanh.pop %v865
    %868 = vrot.lane.b32.xlu0 %v866, 64
    %v869 = vpop.permute.xlu0 %868
    %v871 = vmul.f32 %v853, %v869
    %873 = vrot.lane.b32.xlu0 %v871, 32
    %v874 = vpop.permute.xlu0 %873
    %v875 = vsel %vm59, %v874, 0
    %877 = vmatpush.msra.mxu0 0.0
    %878 = vmatpush.msra.mxu0 0.0
    %879 = vmatpush.msra.mxu0 0.0
    %880 = vmatpush.msra.mxu0 0.0
    %881 = vmatpush.msra.mxu0 0.0
    %882 = vmatpush.msra.mxu0 0.0
    %883 = vmatpush.msra.mxu0 0.0
    %884 = vmatpush.msra.mxu0 0.0
    %885 = vmatpush.msra.mxu0 0.0
    %886 = vmatpush.msra.mxu0 0.0
    %887 = vmatpush.msra.mxu0 0.0
    %888 = vmatpush.msra.mxu0 0.0
    %889 = vmatpush.msra.mxu0 %v636
    %890 = vmatpush.msra.mxu0 %v635
    %891 = vmatpush.msra.mxu0 %v634
    %892 = vmatpush.msra.mxu0 %v633
    %893 = vmatmul.f32.gmra.mxu0 %v875
    %v894 = vpop.f32.mrf.mxu0
    %v895 = vadd.f32 0.0, %v894
    %896 = vdwg.mxu0
    %v897 = vadd.f32 %v674, %v895
    %v898 = vxor.u32 %v897, 2147483648
    %v899 = vmul.f32 %v898, 1.442695
    %v900 = vpow.pop %v899
    %v901 = vadd.f32 %v900, 1.0
    %v902 = vrcp.pop %v901
    %v903 = vmul.f32 %v901, %v902
    %v904 = vsub.f32 1.0, %v903
    %v905 = vmul.f32 %v902, %v904
    %v906 = vadd.f32 %v902, %v905
    %vm907 = vweird.f32 %v901
    %vm908 = vweird.f32 %v902
    %vm909 = vmor %vm907, %vm908
    %v910 = vsel %vm909, %v902, %v906
    %v911 = vand.u32 2147483647, %v901
    %vm912 = vcmp.eq.f32.partialorder %v911, 8.507059e+37
    %v913 = vand.u32 %v901, 2147483648
    %v914 = vor.u32 1.1754944e-38, %v913
    %v915 = vsel %vm912, %v914, %v910
    %v916 = vmul.f32 1.0, %v915
    %v917 = vtanh.pop %v897
    %v918 = vmul.f32 %v916, %v865
    %920 = vrot.lane.b32.xlu0 %v917, 64
    %v921 = vpop.permute.xlu0 %920
    %v923 = vmul.f32 %v916, %v921
    %925 = vrot.lane.b32.xlu0 %v923, 32
    %v926 = vpop.permute.xlu0 %925
    %v928 = vadd.f32 %v918, %v926
    %v929 = vtanh.pop %v928
    %931 = vrot.lane.b32.xlu0 %v929, 64
    %v932 = vpop.permute.xlu0 %931
    %v934 = vmul.f32 %v916, %v932
    %936 = vrot.lane.b32.xlu0 %v934, 32
    %v937 = vpop.permute.xlu0 %936
    %v938 = vsel %vm59, %v937, 0
    %940 = vmatpush.msra.mxu0 0.0
    %941 = vmatpush.msra.mxu0 0.0
    %942 = vmatpush.msra.mxu0 0.0
    %943 = vmatpush.msra.mxu0 0.0
    %944 = vmatpush.msra.mxu0 0.0
    %945 = vmatpush.msra.mxu0 0.0
    %946 = vmatpush.msra.mxu0 0.0
    %947 = vmatpush.msra.mxu0 0.0
    %948 = vmatpush.msra.mxu0 0.0
    %949 = vmatpush.msra.mxu0 0.0
    %950 = vmatpush.msra.mxu0 0.0
    %951 = vmatpush.msra.mxu0 0.0
    %952 = vmatpush.msra.mxu0 %v636
    %953 = vmatpush.msra.mxu0 %v635
    %954 = vmatpush.msra.mxu0 %v634
    %955 = vmatpush.msra.mxu0 %v633
    %956 = vmatmul.f32.gmra.mxu0 %v938
    %v957 = vpop.f32.mrf.mxu0
    %v958 = vadd.f32 0.0, %v957
    %959 = vdwg.mxu0
    %v960 = vadd.f32 %v677, %v958
    %v961 = vxor.u32 %v960, 2147483648
    %v962 = vmul.f32 %v961, 1.442695
    %v963 = vpow.pop %v962
    %v964 = vadd.f32 %v963, 1.0
    %v965 = vrcp.pop %v964
    %v966 = vmul.f32 %v964, %v965
    %v967 = vsub.f32 1.0, %v966
    %v968 = vmul.f32 %v965, %v967
    %v969 = vadd.f32 %v965, %v968
    %vm970 = vweird.f32 %v964
    %vm971 = vweird.f32 %v965
    %vm972 = vmor %vm970, %vm971
    %v973 = vsel %vm972, %v965, %v969
    %v974 = vand.u32 2147483647, %v964
    %vm975 = vcmp.eq.f32.partialorder %v974, 8.507059e+37
    %v976 = vand.u32 %v964, 2147483648
    %v977 = vor.u32 1.1754944e-38, %v976
    %v978 = vsel %vm975, %v977, %v973
    %v979 = vmul.f32 1.0, %v978
    %v980 = vtanh.pop %v960
    %v981 = vmul.f32 %v979, %v928
    %983 = vrot.lane.b32.xlu0 %v980, 64
    %v984 = vpop.permute.xlu0 %983
    %v986 = vmul.f32 %v979, %v984
    %988 = vrot.lane.b32.xlu0 %v986, 32
    %v989 = vpop.permute.xlu0 %988
    %v991 = vadd.f32 %v981, %v989
    %v992 = vtanh.pop %v991
    %994 = vrot.lane.b32.xlu0 %v992, 64
    %v995 = vpop.permute.xlu0 %994
    %v997 = vmul.f32 %v979, %v995
    %999 = vrot.lane.b32.xlu0 %v997, 32
    %v1000 = vpop.permute.xlu0 %999
    %v1001 = vsel %vm59, %v1000, 0
    %1003 = vmatpush.msra.mxu0 0.0
    %1004 = vmatpush.msra.mxu0 0.0
    %1005 = vmatpush.msra.mxu0 0.0
    %1006 = vmatpush.msra.mxu0 0.0
    %1007 = vmatpush.msra.mxu0 0.0
    %1008 = vmatpush.msra.mxu0 0.0
    %1009 = vmatpush.msra.mxu0 0.0
    %1010 = vmatpush.msra.mxu0 0.0
    %1011 = vmatpush.msra.mxu0 0.0
    %1012 = vmatpush.msra.mxu0 0.0
    %1013 = vmatpush.msra.mxu0 0.0
    %1014 = vmatpush.msra.mxu0 0.0
    %1015 = vmatpush.msra.mxu0 %v636
    %1016 = vmatpush.msra.mxu0 %v635
    %1017 = vmatpush.msra.mxu0 %v634
    %1018 = vmatpush.msra.mxu0 %v633
    %1019 = vmatmul.f32.gmra.mxu0 %v1001
    %v1020 = vpop.f32.mrf.mxu0
    %v1021 = vadd.f32 0.0, %v1020
    %1022 = vdwg.mxu0
    %v1023 = vadd.f32 %v680, %v1021
    %v1024 = vxor.u32 %v1023, 2147483648
    %v1025 = vmul.f32 %v1024, 1.442695
    %v1026 = vpow.pop %v1025
    %v1027 = vadd.f32 %v1026, 1.0
    %v1028 = vrcp.pop %v1027
    %v1029 = vmul.f32 %v1027, %v1028
    %v1030 = vsub.f32 1.0, %v1029
    %v1031 = vmul.f32 %v1028, %v1030
    %v1032 = vadd.f32 %v1028, %v1031
    %vm1033 = vweird.f32 %v1027
    %vm1034 = vweird.f32 %v1028
    %vm1035 = vmor %vm1033, %vm1034
    %v1036 = vsel %vm1035, %v1028, %v1032
    %v1037 = vand.u32 2147483647, %v1027
    %vm1038 = vcmp.eq.f32.partialorder %v1037, 8.507059e+37
    %v1039 = vand.u32 %v1027, 2147483648
    %v1040 = vor.u32 1.1754944e-38, %v1039
    %v1041 = vsel %vm1038, %v1040, %v1036
    %v1042 = vmul.f32 1.0, %v1041
    %v1043 = vtanh.pop %v1023
    %v1044 = vmul.f32 %v1042, %v991
    %1046 = vrot.lane.b32.xlu0 %v1043, 64
    %v1047 = vpop.permute.xlu0 %1046
    %v1049 = vmul.f32 %v1042, %v1047
    %1051 = vrot.lane.b32.xlu0 %v1049, 32
    %v1052 = vpop.permute.xlu0 %1051
    %v1054 = vadd.f32 %v1044, %v1052
    %v1055 = vtanh.pop %v1054
    %1057 = vrot.lane.b32.xlu0 %v1055, 64
    %v1058 = vpop.permute.xlu0 %1057
    %v1060 = vmul.f32 %v1042, %v1058
    %1062 = vrot.lane.b32.xlu0 %v1060, 32
    %v1063 = vpop.permute.xlu0 %1062
    %v1064 = vsel %vm59, %v1063, 0
    %1066 = vmatpush.msra.mxu0 0.0
    %1067 = vmatpush.msra.mxu0 0.0
    %1068 = vmatpush.msra.mxu0 0.0
    %1069 = vmatpush.msra.mxu0 0.0
    %1070 = vmatpush.msra.mxu0 0.0
    %1071 = vmatpush.msra.mxu0 0.0
    %1072 = vmatpush.msra.mxu0 0.0
    %1073 = vmatpush.msra.mxu0 0.0
    %1074 = vmatpush.msra.mxu0 0.0
    %1075 = vmatpush.msra.mxu0 0.0
    %1076 = vmatpush.msra.mxu0 0.0
    %1077 = vmatpush.msra.mxu0 0.0
    %1078 = vmatpush.msra.mxu0 %v636
    %1079 = vmatpush.msra.mxu0 %v635
    %1080 = vmatpush.msra.mxu0 %v634
    %1081 = vmatpush.msra.mxu0 %v633
    %1082 = vmatmul.f32.gmra.mxu0 %v1064
    %v1083 = vpop.f32.mrf.mxu0
    %v1084 = vadd.f32 0.0, %v1083
    %1085 = vdwg.mxu0
    %v1086 = vadd.f32 %v683, %v1084
    %v1087 = vxor.u32 %v1086, 2147483648
    %v1088 = vmul.f32 %v1087, 1.442695
    %v1089 = vpow.pop %v1088
    %v1090 = vadd.f32 %v1089, 1.0
    %v1091 = vrcp.pop %v1090
    %v1092 = vmul.f32 %v1090, %v1091
    %v1093 = vsub.f32 1.0, %v1092
    %v1094 = vmul.f32 %v1091, %v1093
    %v1095 = vadd.f32 %v1091, %v1094
    %vm1096 = vweird.f32 %v1090
    %vm1097 = vweird.f32 %v1091
    %vm1098 = vmor %vm1096, %vm1097
    %v1099 = vsel %vm1098, %v1091, %v1095
    %v1100 = vand.u32 2147483647, %v1090
    %vm1101 = vcmp.eq.f32.partialorder %v1100, 8.507059e+37
    %v1102 = vand.u32 %v1090, 2147483648
    %v1103 = vor.u32 1.1754944e-38, %v1102
    %v1104 = vsel %vm1101, %v1103, %v1099
    %v1105 = vmul.f32 1.0, %v1104
    %v1106 = vtanh.pop %v1086
    %v1107 = vmul.f32 %v1105, %v1054
    %1109 = vrot.lane.b32.xlu0 %v1106, 64
    %v1110 = vpop.permute.xlu0 %1109
    %v1112 = vmul.f32 %v1105, %v1110
    %1114 = vrot.lane.b32.xlu0 %v1112, 32
    %v1115 = vpop.permute.xlu0 %1114
    %v1117 = vadd.f32 %v1107, %v1115
    %v1118 = vtanh.pop %v1117
    %1120 = vrot.lane.b32.xlu0 %v1118, 64
    %v1121 = vpop.permute.xlu0 %1120
    %v1123 = vmul.f32 %v1105, %v1121
    %1125 = vrot.lane.b32.xlu0 %v1123, 32
    %v1126 = vpop.permute.xlu0 %1125
    %v1127 = vsel %vm59, %v1126, 0
    %1129 = vmatpush.msra.mxu0 0.0
    %1130 = vmatpush.msra.mxu0 0.0
    %1131 = vmatpush.msra.mxu0 0.0
    %1132 = vmatpush.msra.mxu0 0.0
    %1133 = vmatpush.msra.mxu0 0.0
    %1134 = vmatpush.msra.mxu0 0.0
    %1135 = vmatpush.msra.mxu0 0.0
    %1136 = vmatpush.msra.mxu0 0.0
    %1137 = vmatpush.msra.mxu0 0.0
    %1138 = vmatpush.msra.mxu0 0.0
    %1139 = vmatpush.msra.mxu0 0.0
    %1140 = vmatpush.msra.mxu0 0.0
    %1141 = vmatpush.msra.mxu0 %v636
    %1142 = vmatpush.msra.mxu0 %v635
    %1143 = vmatpush.msra.mxu0 %v634
    %1144 = vmatpush.msra.mxu0 %v633
    %1145 = vmatmul.f32.gmra.mxu0 %v1127
    %v1146 = vpop.f32.mrf.mxu0
    %v1147 = vadd.f32 0.0, %v1146
    %1148 = vdwg.mxu0
    %v1149 = vadd.f32 %v686, %v1147
    %v1150 = vxor.u32 %v1149, 2147483648
    %v1151 = vmul.f32 %v1150, 1.442695
    %v1152 = vpow.pop %v1151
    %v1153 = vadd.f32 %v1152, 1.0
    %v1154 = vrcp.pop %v1153
    %v1155 = vmul.f32 %v1153, %v1154
    %v1156 = vsub.f32 1.0, %v1155
    %v1157 = vmul.f32 %v1154, %v1156
    %v1158 = vadd.f32 %v1154, %v1157
    %vm1159 = vweird.f32 %v1153
    %vm1160 = vweird.f32 %v1154
    %vm1161 = vmor %vm1159, %vm1160
    %v1162 = vsel %vm1161, %v1154, %v1158
    %v1163 = vand.u32 2147483647, %v1153
    %vm1164 = vcmp.eq.f32.partialorder %v1163, 8.507059e+37
    %v1165 = vand.u32 %v1153, 2147483648
    %v1166 = vor.u32 1.1754944e-38, %v1165
    %v1167 = vsel %vm1164, %v1166, %v1162
    %v1168 = vmul.f32 1.0, %v1167
    %v1169 = vtanh.pop %v1149
    %v1170 = vmul.f32 %v1168, %v1117
    %1172 = vrot.lane.b32.xlu0 %v1169, 64
    %v1173 = vpop.permute.xlu0 %1172
    %v1175 = vmul.f32 %v1168, %v1173
    %1177 = vrot.lane.b32.xlu0 %v1175, 32
    %v1178 = vpop.permute.xlu0 %1177
    %v1180 = vadd.f32 %v1170, %v1178
    %v1181 = vtanh.pop %v1180
    %1183 = vrot.lane.b32.xlu0 %v1181, 64
    %v1184 = vpop.permute.xlu0 %1183
    %v1186 = vmul.f32 %v1168, %v1184
    %v1187 = vld [vmem:[%s4] sm:$0xff]
    %v1188 = vld [vmem:[%s4 + $0x8] sm:$0xff]
    %v1189 = vld [vmem:[%s4 + $0x10] sm:$0xff]
    %v1190 = vld [vmem:[%s4 + $0x18] sm:$0xff]
    %v1191 = vld [vmem:[%s5] sm:$0x1]
    %v1193 = vperm.slane %v1191, 0
    %1196 = vrot.lane.b32.xlu0 %v1186, 32
    %v1197 = vpop.permute.xlu0 %1196
    %v1198 = vsel %vm59, %v1197, 0
    %1200 = vmatpush.msra.mxu0 0.0
    %1201 = vmatpush.msra.mxu0 0.0
    %1202 = vmatpush.msra.mxu0 0.0
    %1203 = vmatpush.msra.mxu0 0.0
    %1204 = vmatpush.msra.mxu0 0.0
    %1205 = vmatpush.msra.mxu0 0.0
    %1206 = vmatpush.msra.mxu0 0.0
    %1207 = vmatpush.msra.mxu0 0.0
    %1208 = vmatpush.msra.mxu0 0.0
    %1209 = vmatpush.msra.mxu0 0.0
    %1210 = vmatpush.msra.mxu0 0.0
    %1211 = vmatpush.msra.mxu0 0.0
    %1212 = vmatpush.msra.mxu0 %v1190
    %1213 = vmatpush.msra.mxu0 %v1189
    %1214 = vmatpush.msra.mxu0 %v1188
    %1215 = vmatpush.msra.mxu0 %v1187
    %1216 = vmatmul.f32.gmra.mxu0 %v1198
    %v1217 = vpop.f32.mrf.mxu0
    %v1218 = vadd.f32 %v1193, %v1217
    %1219 = vdwg.mxu0
    %1220 = vst [vmem:[%s6] sm:$0xff] %v1218
    // Predicated region
    $region30: #{lstm_model_forward.1} parent=1 // pred_check
      _
    $region31: #{lstm_model_forward.1} parent=1 // pred_check_branch
      %1222 = sbr.rel (0) target = $region33
    $region32: #{lstm_model_forward.1} parent=1 // pred_region
      _
    $region33: #{lstm_model_forward.1} parent=1 // pred_fallthru
      _
    // Predicated region
    $region34: #{lstm_model_forward.1} parent=1 // pred_check
      _
    $region35: #{lstm_model_forward.1} parent=1 // pred_check_branch
      %1224 = sbr.rel (0) target = $region37
    $region36: #{lstm_model_forward.1} parent=1 // pred_region
      _
    $region37: #{lstm_model_forward.1} parent=1 // pred_fallthru
      _
    %1225 = vsyncpa [#allocation3], 1

</llo_original>
